<compile_context>
chip_gen: v5e
topology: v5e:2x2
jax: 0.10.0
libtpu: 0.0.40
codegen_flags: <defaults>
</compile_context>

<pallas_src>
import jax
import jax.numpy as jnp
from jax.experimental import pallas as pl
from jax.experimental.pallas import tpu as pltpu

TB = 128                      # batch tile (saturates MXU M on v5e; fine on v6e/v7x)
LOGICAL_DIMS = [(100, 200), (200, 400), (400, 128), (128, 400)]
OUT_DIM = LOGICAL_DIMS[-1][1]             # 400
_pad128 = lambda d: ((d + 127) // 128) * 128
PADDED_DIMS = [(_pad128(i), _pad128(o)) for i, o in LOGICAL_DIMS]
IN_PAD = PADDED_DIMS[0][0]                # 128
OUT_PAD = PADDED_DIMS[-1][1]              # 512


def mlp_kernel(x_ref,
               w1_ref, b1_ref,
               w2_ref, b2_ref,
               w3_ref, b3_ref,
               w4_ref, b4_ref,
               o_ref):
    """One batch tile: (TB, 128) bf16 in -> (TB, 512) f32 out, 4x (MXU matmul + bias + ReLU)."""
    h = x_ref[...]                                           # bf16 (TB, 128)
    h = jnp.maximum(
        jnp.dot(h, w1_ref[...], preferred_element_type=jnp.float32) + b1_ref[...], 0.0)
    h = jnp.maximum(
        jnp.dot(h.astype(jnp.bfloat16), w2_ref[...],
                preferred_element_type=jnp.float32) + b2_ref[...], 0.0)
    h = jnp.maximum(
        jnp.dot(h.astype(jnp.bfloat16), w3_ref[...],
                preferred_element_type=jnp.float32) + b3_ref[...], 0.0)
    h = jnp.maximum(
        jnp.dot(h.astype(jnp.bfloat16), w4_ref[...],
                preferred_element_type=jnp.float32) + b4_ref[...], 0.0)
    o_ref[...] = h.astype(o_ref.dtype)                       # f32 (TB, 512)


def meta_forward(x, padded_params):
    """x: (B, 100) f32.  padded_params: list of (W bf16 (in_p,out_p), b f32 (1,out_p)).
    Returns (B, 400) f32."""
    B = x.shape[0]
    b_pad = pl.cdiv(B, TB) * TB

    # Pad batch to a multiple of TB and features to 128; cast to bf16.
    x_p = jnp.zeros((b_pad, IN_PAD), jnp.bfloat16)
    x_p = x_p.at[:B, : x.shape[1]].set(x.astype(jnp.bfloat16))

    flat_args = [x_p]
    in_specs = [pl.BlockSpec((TB, IN_PAD), lambda i: (i, 0))]
    for w, b in padded_params:
        flat_args.extend([w, b])
        # Constant index maps: weights/biases resident in VMEM across the grid.
        in_specs.append(pl.BlockSpec(w.shape, lambda i: (0, 0)))
        in_specs.append(pl.BlockSpec(b.shape, lambda i: (0, 0)))

    out = pl.pallas_call(
        mlp_kernel,
        out_shape=jax.ShapeDtypeStruct((b_pad, OUT_PAD), jnp.float32),
        grid=(b_pad // TB,),
        in_specs=in_specs,
        out_specs=pl.BlockSpec((TB, OUT_PAD), lambda i: (i, 0)),
        compiler_params=pltpu.CompilerParams(
            dimension_semantics=("parallel",)),
    )(*flat_args)
    return out[:B, :OUT_DIM]


def init_params(key):
    """PyTorch-default-style init (U(-1/sqrt(in), 1/sqrt(in))) on the logical shapes.
    Returns (logical f32 params, padded kernel params)."""
    logical, padded = [], []
    for i, ((din, dout), (din_p, dout_p)) in enumerate(zip(LOGICAL_DIMS, PADDED_DIMS)):
        kw, kb, key = jax.random.split(jax.random.fold_in(key, i), 3)
        bound = 1.0 / jnp.sqrt(jnp.float32(din))
        w = jax.random.uniform(kw, (din, dout), jnp.float32, -bound, bound)
        b = jax.random.uniform(kb, (1, dout), jnp.float32, -bound, bound)
        logical.append((w, b))
        w_p = jnp.zeros((din_p, dout_p), jnp.bfloat16).at[:din, :dout].set(
            w.astype(jnp.bfloat16))
        b_p = jnp.zeros((1, dout_p), jnp.float32).at[:, :dout].set(b)
        padded.append((w_p, b_p))
    return logical, padded


def reference_forward(x, logical_params):
    """Pure-JAX reference mirroring the kernel's precision (bf16 matmul, f32 acc/bias)."""
    h = x.astype(jnp.bfloat16)
    for w, b in logical_params:
        acc = jnp.dot(h, w.astype(jnp.bfloat16), preferred_element_type=jnp.float32)
        h = jnp.maximum(acc + b, 0.0)
        h = h.astype(jnp.bfloat16)
    return h.astype(jnp.float32)


if __name__ == "__main__":
    key = jax.random.PRNGKey(0)
    kx, kp = jax.random.split(key)

    B = 256                                   # 2 batch tiles of 128
    x = jax.random.normal(kx, (B, 100), jnp.float32)
    logical_params, padded_params = init_params(kp)

    out = meta_forward(x, padded_params)
    out = jax.block_until_ready(out)

    ref = reference_forward(x, logical_params)
    assert out.shape == (B, OUT_DIM), out.shape
    assert jnp.allclose(out, ref, atol=1e-2, rtol=1e-2), "mismatch vs reference"

    print("KERNEL_OK")
</pallas_src>

<mosaic_0001>
module attributes {stable_mosaic.version = 11 : i64} {
  func.func @mlp_kernel(%arg0: i32, %arg1: memref<128x128xbf16, #tpu.memory_space<vmem>>, %arg2: memref<128x256xbf16, #tpu.memory_space<vmem>>, %arg3: memref<1x256xf32, #tpu.memory_space<vmem>>, %arg4: memref<256x512xbf16, #tpu.memory_space<vmem>>, %arg5: memref<1x512xf32, #tpu.memory_space<vmem>>, %arg6: memref<512x128xbf16, #tpu.memory_space<vmem>>, %arg7: memref<1x128xf32, #tpu.memory_space<vmem>>, %arg8: memref<128x512xbf16, #tpu.memory_space<vmem>>, %arg9: memref<1x512xf32, #tpu.memory_space<vmem>>, %arg10: memref<128x512xf32, #tpu.memory_space<vmem>>) attributes {dimension_semantics = [#tpu.dimension_semantics<parallel>], iteration_bounds = array<i64: 2>, scalar_prefetch = 0 : i64, scratch_operands = 0 : i64, tpu.core_type = #tpu.core_type<tc>, window_params = [{transform_indices = @transform_0, window_bounds = array<i64: 128, 128>}, {pipeline_mode = #tpu.pipeline_mode<synchronous>, transform_indices = @transform_1, window_bounds = array<i64: 128, 256>}, {pipeline_mode = #tpu.pipeline_mode<synchronous>, transform_indices = @transform_2, window_bounds = array<i64: 1, 256>}, {pipeline_mode = #tpu.pipeline_mode<synchronous>, transform_indices = @transform_3, window_bounds = array<i64: 256, 512>}, {pipeline_mode = #tpu.pipeline_mode<synchronous>, transform_indices = @transform_4, window_bounds = array<i64: 1, 512>}, {pipeline_mode = #tpu.pipeline_mode<synchronous>, transform_indices = @transform_5, window_bounds = array<i64: 512, 128>}, {pipeline_mode = #tpu.pipeline_mode<synchronous>, transform_indices = @transform_6, window_bounds = array<i64: 1, 128>}, {pipeline_mode = #tpu.pipeline_mode<synchronous>, transform_indices = @transform_7, window_bounds = array<i64: 128, 512>}, {pipeline_mode = #tpu.pipeline_mode<synchronous>, transform_indices = @transform_8, window_bounds = array<i64: 1, 512>}, {transform_indices = @transform_9, window_bounds = array<i64: 128, 512>}]} {
    %c0 = arith.constant 0 : index
    %c0_0 = arith.constant 0 : index
    %0 = vector.load %arg1[%c0, %c0_0] : memref<128x128xbf16, #tpu.memory_space<vmem>>, vector<128x128xbf16>
    %c0_1 = arith.constant 0 : index
    %c0_2 = arith.constant 0 : index
    %1 = vector.load %arg2[%c0_1, %c0_2] : memref<128x256xbf16, #tpu.memory_space<vmem>>, vector<128x256xbf16>
    %cst = arith.constant dense<0.000000e+00> : vector<128x256xf32>
    %2 = tpu.matmul %0, %1, %cst {dimension_numbers = #tpu.dot_dimension_numbers<[1], [0], [0], [1], [0, 0, 1, 1], [], []>} : vector<128x128xbf16>, vector<128x256xbf16>, vector<128x256xf32> -> vector<128x256xf32>
    %c0_3 = arith.constant 0 : index
    %c0_4 = arith.constant 0 : index
    %3 = vector.load %arg3[%c0_3, %c0_4] : memref<1x256xf32, #tpu.memory_space<vmem>>, vector<1x256xf32>
    %4 = vector.broadcast %3 : vector<1x256xf32> to vector<128x256xf32>
    %5 = arith.addf %2, %4 : vector<128x256xf32>
    %cst_5 = arith.constant 0.000000e+00 : f32
    %6 = vector.broadcast %cst_5 : f32 to vector<128x256xf32>
    %7 = arith.maximumf %5, %6 : vector<128x256xf32>
    %8 = arith.truncf %7 : vector<128x256xf32> to vector<128x256xbf16>
    %c0_6 = arith.constant 0 : index
    %c0_7 = arith.constant 0 : index
    %9 = vector.load %arg4[%c0_6, %c0_7] : memref<256x512xbf16, #tpu.memory_space<vmem>>, vector<256x512xbf16>
    %cst_8 = arith.constant dense<0.000000e+00> : vector<128x512xf32>
    %10 = tpu.matmul %8, %9, %cst_8 {dimension_numbers = #tpu.dot_dimension_numbers<[1], [0], [0], [1], [0, 0, 1, 1], [], []>} : vector<128x256xbf16>, vector<256x512xbf16>, vector<128x512xf32> -> vector<128x512xf32>
    %c0_9 = arith.constant 0 : index
    %c0_10 = arith.constant 0 : index
    %11 = vector.load %arg5[%c0_9, %c0_10] : memref<1x512xf32, #tpu.memory_space<vmem>>, vector<1x512xf32>
    %12 = vector.broadcast %11 : vector<1x512xf32> to vector<128x512xf32>
    %13 = arith.addf %10, %12 : vector<128x512xf32>
    %cst_11 = arith.constant 0.000000e+00 : f32
    %14 = vector.broadcast %cst_11 : f32 to vector<128x512xf32>
    %15 = arith.maximumf %13, %14 : vector<128x512xf32>
    %16 = arith.truncf %15 : vector<128x512xf32> to vector<128x512xbf16>
    %c0_12 = arith.constant 0 : index
    %c0_13 = arith.constant 0 : index
    %17 = vector.load %arg6[%c0_12, %c0_13] : memref<512x128xbf16, #tpu.memory_space<vmem>>, vector<512x128xbf16>
    %cst_14 = arith.constant dense<0.000000e+00> : vector<128x128xf32>
    %18 = tpu.matmul %16, %17, %cst_14 {dimension_numbers = #tpu.dot_dimension_numbers<[1], [0], [0], [1], [0, 0, 1, 1], [], []>} : vector<128x512xbf16>, vector<512x128xbf16>, vector<128x128xf32> -> vector<128x128xf32>
    %c0_15 = arith.constant 0 : index
    %c0_16 = arith.constant 0 : index
    %19 = vector.load %arg7[%c0_15, %c0_16] : memref<1x128xf32, #tpu.memory_space<vmem>>, vector<1x128xf32>
    %20 = vector.broadcast %19 : vector<1x128xf32> to vector<128x128xf32>
    %21 = arith.addf %18, %20 : vector<128x128xf32>
    %cst_17 = arith.constant 0.000000e+00 : f32
    %22 = vector.broadcast %cst_17 : f32 to vector<128x128xf32>
    %23 = arith.maximumf %21, %22 : vector<128x128xf32>
    %24 = arith.truncf %23 : vector<128x128xf32> to vector<128x128xbf16>
    %c0_18 = arith.constant 0 : index
    %c0_19 = arith.constant 0 : index
    %25 = vector.load %arg8[%c0_18, %c0_19] : memref<128x512xbf16, #tpu.memory_space<vmem>>, vector<128x512xbf16>
    %cst_20 = arith.constant dense<0.000000e+00> : vector<128x512xf32>
    %26 = tpu.matmul %24, %25, %cst_20 {dimension_numbers = #tpu.dot_dimension_numbers<[1], [0], [0], [1], [0, 0, 1, 1], [], []>} : vector<128x128xbf16>, vector<128x512xbf16>, vector<128x512xf32> -> vector<128x512xf32>
    %c0_21 = arith.constant 0 : index
    %c0_22 = arith.constant 0 : index
    %27 = vector.load %arg9[%c0_21, %c0_22] : memref<1x512xf32, #tpu.memory_space<vmem>>, vector<1x512xf32>
    %28 = vector.broadcast %27 : vector<1x512xf32> to vector<128x512xf32>
    %29 = arith.addf %26, %28 : vector<128x512xf32>
    %cst_23 = arith.constant 0.000000e+00 : f32
    %30 = vector.broadcast %cst_23 : f32 to vector<128x512xf32>
    %31 = arith.maximumf %29, %30 : vector<128x512xf32>
    %c0_24 = arith.constant 0 : index
    %c0_25 = arith.constant 0 : index
    %32 = vector.load %arg10[%c0_24, %c0_25] : memref<128x512xf32, #tpu.memory_space<vmem>>, vector<128x512xf32>
    tpu.vector_store %arg10[%c0_24, %c0_25], %31 {strides = array<i32>} : memref<128x512xf32, #tpu.memory_space<vmem>>, vector<128x512xf32>,
    return
  }
  func.func @transform_0(%arg0: i32) -> (i32, i32) {
    %c0_i32 = arith.constant 0 : i32
    %c0_i32_0 = arith.constant 0 : i32
    return %arg0, %c0_i32 : i32, i32
  }
  func.func @transform_1(%arg0: i32) -> (i32, i32) {
    %c0_i32 = arith.constant 0 : i32
    %c0_i32_0 = arith.constant 0 : i32
    %c0_i32_1 = arith.constant 0 : i32
    return %c0_i32, %c0_i32_0 : i32, i32
  }
  func.func @transform_2(%arg0: i32) -> (i32, i32) {
    %c0_i32 = arith.constant 0 : i32
    %c0_i32_0 = arith.constant 0 : i32
    %c0_i32_1 = arith.constant 0 : i32
    return %c0_i32, %c0_i32_0 : i32, i32
  }
  func.func @transform_3(%arg0: i32) -> (i32, i32) {
    %c0_i32 = arith.constant 0 : i32
    %c0_i32_0 = arith.constant 0 : i32
    %c0_i32_1 = arith.constant 0 : i32
    return %c0_i32, %c0_i32_0 : i32, i32
  }
  func.func @transform_4(%arg0: i32) -> (i32, i32) {
    %c0_i32 = arith.constant 0 : i32
    %c0_i32_0 = arith.constant 0 : i32
    %c0_i32_1 = arith.constant 0 : i32
    return %c0_i32, %c0_i32_0 : i32, i32
  }
  func.func @transform_5(%arg0: i32) -> (i32, i32) {
    %c0_i32 = arith.constant 0 : i32
    %c0_i32_0 = arith.constant 0 : i32
    %c0_i32_1 = arith.constant 0 : i32
    return %c0_i32, %c0_i32_0 : i32, i32
  }
  func.func @transform_6(%arg0: i32) -> (i32, i32) {
    %c0_i32 = arith.constant 0 : i32
    %c0_i32_0 = arith.constant 0 : i32
    %c0_i32_1 = arith.constant 0 : i32
    return %c0_i32, %c0_i32_0 : i32, i32
  }
  func.func @transform_7(%arg0: i32) -> (i32, i32) {
    %c0_i32 = arith.constant 0 : i32
    %c0_i32_0 = arith.constant 0 : i32
    %c0_i32_1 = arith.constant 0 : i32
    return %c0_i32, %c0_i32_0 : i32, i32
  }
  func.func @transform_8(%arg0: i32) -> (i32, i32) {
    %c0_i32 = arith.constant 0 : i32
    %c0_i32_0 = arith.constant 0 : i32
    %c0_i32_1 = arith.constant 0 : i32
    return %c0_i32, %c0_i32_0 : i32, i32
  }
  func.func @transform_9(%arg0: i32) -> (i32, i32) {
    %c0_i32 = arith.constant 0 : i32
    %c0_i32_0 = arith.constant 0 : i32
    return %arg0, %c0_i32 : i32, i32
  }
}

</mosaic_0001>

<llo_original>
// kernel: tpu_custom_call.1
$region0: #{tpu_custom_call.1}
  #allocation0 [shape = 'u32[]', space=smem, size = 0x4, offset = 0x4, fixed_abs, tag = 'smem constant byte address 0x4 - core index']
  #allocation1 [shape = 'u32[72,128]{1,0:T(1,128)}', space=vmem, size = 0x9000, scoped, tag = 'internal scratch']
  %s0 = inlined_call_operand.hbm [shape: bf16[256,128], index: 0, kind: input, shape index: {}]
  %s1 = inlined_call_operand.hbm [shape: bf16[128,256], index: 1, kind: input, shape index: {}]
  %s2 = inlined_call_operand.hbm [shape: f32[1,256], index: 2, kind: input, shape index: {}]
  %s3 = inlined_call_operand.hbm [shape: bf16[256,512], index: 3, kind: input, shape index: {}]
  %s4 = inlined_call_operand.hbm [shape: f32[1,512], index: 4, kind: input, shape index: {}]
  %s5 = inlined_call_operand.hbm [shape: bf16[512,128], index: 5, kind: input, shape index: {}]
  %s6 = inlined_call_operand.vmem [shape: f32[1,128], index: 6, kind: input, shape index: {}]
  %s7 = inlined_call_operand.hbm [shape: bf16[128,512], index: 7, kind: input, shape index: {}]
  %s8 = inlined_call_operand.vmem [shape: f32[1,512], index: 8, kind: input, shape index: {}]
  %s9 = inlined_call_operand.hbm [shape: f32[256,512], index: 9, kind: output, shape index: {}]
  %s10 = sld [smem:[#allocation0]]
  $region97: #{tpu_custom_call.1} parent=0
    _
  %s12 = ssub.s32 1, %s10
  %s13 = scalar_select 0, %s12, %s10
  $region1: #{tpu_custom_call.1} parent=0
    #allocation2 [shape = 'u8[65536]{0}', space=vmem, size = 0x10000, scoped, tag = 'input window, operand 0']
    #allocation3 [shape = 's32[2]{0}', space=sflag, size = 0x8, scoped, tag = 'scoped memory for tpu_custom_call.1']
    #allocation4 [shape = 's32[2]{0}', space=sflag, size = 0x8, scoped, tag = 'scoped memory for tpu_custom_call.1']
    #allocation5 [shape = 'u8[65536]{0}', space=vmem, size = 0x10000, scoped, tag = 'input window, operand 1, single buffered']
    #allocation6 [shape = 's32[1]{0}', space=sflag, size = 0x4, scoped, tag = 'scoped memory for tpu_custom_call.1']
    #allocation7 [shape = 'u8[1024]{0}', space=vmem, size = 0x400, scoped, tag = 'input window, operand 2, single buffered']
    #allocation8 [shape = 'u8[262144]{0}', space=vmem, size = 0x40000, scoped, tag = 'input window, operand 3, single buffered']
    #allocation9 [shape = 's32[1]{0}', space=sflag, size = 0x4, scoped, tag = 'scoped memory for tpu_custom_call.1']
    #allocation10 [shape = 'u8[2048]{0}', space=vmem, size = 0x800, scoped, tag = 'input window, operand 4, single buffered']
    #allocation11 [shape = 'u8[131072]{0}', space=vmem, size = 0x20000, scoped, tag = 'input window, operand 5, single buffered']
    #allocation12 [shape = 's32[1]{0}', space=sflag, size = 0x4, scoped, tag = 'scoped memory for tpu_custom_call.1']
    #allocation13 [shape = 'u8[131072]{0}', space=vmem, size = 0x20000, scoped, tag = 'input window, operand 7, single buffered']
    #allocation14 [shape = 'u8[524288]{0}', space=vmem, size = 0x80000, scoped, tag = 'output window, operand 0']
    %14 = vsyncpa [#allocation3], 0
    %s15 = scalar_lea.sflag [#allocation3], 1
    %16 = vsyncpa %s15, 0
    %17 = vsyncpa [#allocation6], 0
    %18 = vsyncpa [#allocation9], 0
    %19 = vsyncpa [#allocation12], 0
    %20 = vsyncpa [#allocation4], 0
    %s21 = scalar_lea.sflag [#allocation4], 1
    %22 = vsyncpa %s21, 0
    loop: start=0, step=1, limit=4
    $region2: #{tpu_custom_call.1} parent=1 // loop_pre_header
      _
    $region3: #{tpu_custom_call.1} parent=1 // loop_header
      %s24 = sphi 0, %s28
      %p25 = scmp.ge.s32.totalorder %s24, 4
      %s34 = sphi 0, %s36
      %s37 = sphi 0, %s34
      %s38 = sphi 0, %s37
      %s54 = sphi 0, %s38
      %s58 = sphi 0, %s58
      %s60 = sphi 0, %s58
      %s61 = sphi 0, %s60
      %s75 = sphi 0, %s61
      %s79 = sphi 0, %s79
      %s81 = sphi 0, %s79
      %s82 = sphi 0, %s81
      %s96 = sphi 0, %s82
      %s100 = sphi 0, %s100
      %s102 = sphi 0, %s100
      %s103 = sphi 0, %s102
      %s117 = sphi 0, %s103
      %s121 = sphi 0, %s121
      %s123 = sphi 0, %s121
      %s124 = sphi 0, %s123
      %s138 = sphi 0, %s124
      %s142 = sphi 0, %s142
      %s144 = sphi 0, %s142
      %s145 = sphi 0, %s144
      %s159 = sphi 0, %s145
      %s163 = sphi 0, %s163
      %s165 = sphi 0, %s163
      %s166 = sphi 0, %s165
      %s180 = sphi 0, %s166
      %s184 = sphi 0, %s184
      %s186 = sphi 0, %s184
      %s187 = sphi 0, %s186
      %s201 = sphi 0, %s187
      %s205 = sphi 0, %s205
      %s207 = sphi 0, %s205
      %s208 = sphi 0, %s207
      %s222 = sphi 0, %s208
      %s228 = sphi 0, %s230
      %s231 = sphi 0, %s228
      %s232 = sphi 0, %s231
      %s248 = sphi 0, %s232
    $region4: #{tpu_custom_call.1} parent=1 // loop_header_branch
      %27 = sbr.rel (%p25) target = $region8
    $region5: #{tpu_custom_call.1} parent=1 // loop_body
      %s29 = ssub.s32 %s24, 1
      %s30 = ssub.s32 %s24, 2
      %s31 = sadd.s32 %s24, 1
      %s32 = ssub.s32 %s24, %s31
      %p33 = scmp.eq.s32.totalorder %s32, 0
      %s35 = sadd.s32 %s34, 1
      %s36 = scalar_select %p33, %s34, %s35
      %p39 = pneg %p33
      %p40 = scmp.eq.s32.totalorder %s24, 1
      %p41 = por %p39, %p40
      %p42 = scmp.ne.s32.totalorder %s34, %s37
      %p43 = scmp.eq.s32.totalorder %s24, 0
      %p44 = por %p42, %p43
      %p45 = scmp.ne.s32.totalorder %s34, %s37
      %p46 = scmp.eq.s32.totalorder %s29, 1
      %p47 = por %p45, %p46
      %p48 = scmp.ne.s32.totalorder %s37, %s38
      %p49 = scmp.eq.s32.totalorder %s29, 0
      %p50 = por %p48, %p49
      %p51 = scmp.ne.s32.totalorder %s37, %s38
      %p52 = scmp.eq.s32.totalorder %s30, 1
      %p53 = por %p51, %p52
      %p55 = scmp.ne.s32.totalorder %s38, %s54
      %p56 = scmp.eq.s32.totalorder %s30, 0
      %p57 = por %p55, %p56
      %s59 = sadd.s32 %s58, 1
      %p62 = scmp.eq.s32.totalorder %s24, 1
      %p63 = scmp.ne.s32.totalorder %s58, %s60
      %p64 = scmp.eq.s32.totalorder %s24, 0
      %p65 = por %p63, %p64
      %p66 = scmp.ne.s32.totalorder %s58, %s60
      %p67 = scmp.eq.s32.totalorder %s29, 1
      %p68 = por %p66, %p67
      %p69 = scmp.ne.s32.totalorder %s60, %s61
      %p70 = scmp.eq.s32.totalorder %s29, 0
      %p71 = por %p69, %p70
      %p72 = scmp.ne.s32.totalorder %s60, %s61
      %p73 = scmp.eq.s32.totalorder %s30, 1
      %p74 = por %p72, %p73
      %p76 = scmp.ne.s32.totalorder %s61, %s75
      %p77 = scmp.eq.s32.totalorder %s30, 0
      %p78 = por %p76, %p77
      %s80 = sadd.s32 %s79, 1
      %p83 = scmp.eq.s32.totalorder %s24, 1
      %p84 = scmp.ne.s32.totalorder %s79, %s81
      %p85 = scmp.eq.s32.totalorder %s24, 0
      %p86 = por %p84, %p85
      %p87 = scmp.ne.s32.totalorder %s79, %s81
      %p88 = scmp.eq.s32.totalorder %s29, 1
      %p89 = por %p87, %p88
      %p90 = scmp.ne.s32.totalorder %s81, %s82
      %p91 = scmp.eq.s32.totalorder %s29, 0
      %p92 = por %p90, %p91
      %p93 = scmp.ne.s32.totalorder %s81, %s82
      %p94 = scmp.eq.s32.totalorder %s30, 1
      %p95 = por %p93, %p94
      %p97 = scmp.ne.s32.totalorder %s82, %s96
      %p98 = scmp.eq.s32.totalorder %s30, 0
      %p99 = por %p97, %p98
      %s101 = sadd.s32 %s100, 1
      %p104 = scmp.eq.s32.totalorder %s24, 1
      %p105 = scmp.ne.s32.totalorder %s100, %s102
      %p106 = scmp.eq.s32.totalorder %s24, 0
      %p107 = por %p105, %p106
      %p108 = scmp.ne.s32.totalorder %s100, %s102
      %p109 = scmp.eq.s32.totalorder %s29, 1
      %p110 = por %p108, %p109
      %p111 = scmp.ne.s32.totalorder %s102, %s103
      %p112 = scmp.eq.s32.totalorder %s29, 0
      %p113 = por %p111, %p112
      %p114 = scmp.ne.s32.totalorder %s102, %s103
      %p115 = scmp.eq.s32.totalorder %s30, 1
      %p116 = por %p114, %p115
      %p118 = scmp.ne.s32.totalorder %s103, %s117
      %p119 = scmp.eq.s32.totalorder %s30, 0
      %p120 = por %p118, %p119
      %s122 = sadd.s32 %s121, 1
      %p125 = scmp.eq.s32.totalorder %s24, 1
      %p126 = scmp.ne.s32.totalorder %s121, %s123
      %p127 = scmp.eq.s32.totalorder %s24, 0
      %p128 = por %p126, %p127
      %p129 = scmp.ne.s32.totalorder %s121, %s123
      %p130 = scmp.eq.s32.totalorder %s29, 1
      %p131 = por %p129, %p130
      %p132 = scmp.ne.s32.totalorder %s123, %s124
      %p133 = scmp.eq.s32.totalorder %s29, 0
      %p134 = por %p132, %p133
      %p135 = scmp.ne.s32.totalorder %s123, %s124
      %p136 = scmp.eq.s32.totalorder %s30, 1
      %p137 = por %p135, %p136
      %p139 = scmp.ne.s32.totalorder %s124, %s138
      %p140 = scmp.eq.s32.totalorder %s30, 0
      %p141 = por %p139, %p140
      %s143 = sadd.s32 %s142, 1
      %p146 = scmp.eq.s32.totalorder %s24, 1
      %p147 = scmp.ne.s32.totalorder %s142, %s144
      %p148 = scmp.eq.s32.totalorder %s24, 0
      %p149 = por %p147, %p148
      %p150 = scmp.ne.s32.totalorder %s142, %s144
      %p151 = scmp.eq.s32.totalorder %s29, 1
      %p152 = por %p150, %p151
      %p153 = scmp.ne.s32.totalorder %s144, %s145
      %p154 = scmp.eq.s32.totalorder %s29, 0
      %p155 = por %p153, %p154
      %p156 = scmp.ne.s32.totalorder %s144, %s145
      %p157 = scmp.eq.s32.totalorder %s30, 1
      %p158 = por %p156, %p157
      %p160 = scmp.ne.s32.totalorder %s145, %s159
      %p161 = scmp.eq.s32.totalorder %s30, 0
      %p162 = por %p160, %p161
      %s164 = sadd.s32 %s163, 1
      %p167 = scmp.eq.s32.totalorder %s24, 1
      %p168 = scmp.ne.s32.totalorder %s163, %s165
      %p169 = scmp.eq.s32.totalorder %s24, 0
      %p170 = por %p168, %p169
      %p171 = scmp.ne.s32.totalorder %s163, %s165
      %p172 = scmp.eq.s32.totalorder %s29, 1
      %p173 = por %p171, %p172
      %p174 = scmp.ne.s32.totalorder %s165, %s166
      %p175 = scmp.eq.s32.totalorder %s29, 0
      %p176 = por %p174, %p175
      %p177 = scmp.ne.s32.totalorder %s165, %s166
      %p178 = scmp.eq.s32.totalorder %s30, 1
      %p179 = por %p177, %p178
      %p181 = scmp.ne.s32.totalorder %s166, %s180
      %p182 = scmp.eq.s32.totalorder %s30, 0
      %p183 = por %p181, %p182
      %s185 = sadd.s32 %s184, 1
      %p188 = scmp.eq.s32.totalorder %s24, 1
      %p189 = scmp.ne.s32.totalorder %s184, %s186
      %p190 = scmp.eq.s32.totalorder %s24, 0
      %p191 = por %p189, %p190
      %p192 = scmp.ne.s32.totalorder %s184, %s186
      %p193 = scmp.eq.s32.totalorder %s29, 1
      %p194 = por %p192, %p193
      %p195 = scmp.ne.s32.totalorder %s186, %s187
      %p196 = scmp.eq.s32.totalorder %s29, 0
      %p197 = por %p195, %p196
      %p198 = scmp.ne.s32.totalorder %s186, %s187
      %p199 = scmp.eq.s32.totalorder %s30, 1
      %p200 = por %p198, %p199
      %p202 = scmp.ne.s32.totalorder %s187, %s201
      %p203 = scmp.eq.s32.totalorder %s30, 0
      %p204 = por %p202, %p203
      %s206 = sadd.s32 %s205, 1
      %p209 = scmp.eq.s32.totalorder %s24, 1
      %p210 = scmp.ne.s32.totalorder %s205, %s207
      %p211 = scmp.eq.s32.totalorder %s24, 0
      %p212 = por %p210, %p211
      %p213 = scmp.ne.s32.totalorder %s205, %s207
      %p214 = scmp.eq.s32.totalorder %s29, 1
      %p215 = por %p213, %p214
      %p216 = scmp.ne.s32.totalorder %s207, %s208
      %p217 = scmp.eq.s32.totalorder %s29, 0
      %p218 = por %p216, %p217
      %p219 = scmp.ne.s32.totalorder %s207, %s208
      %p220 = scmp.eq.s32.totalorder %s30, 1
      %p221 = por %p219, %p220
      %p223 = scmp.ne.s32.totalorder %s208, %s222
      %p224 = scmp.eq.s32.totalorder %s30, 0
      %p225 = por %p223, %p224
      %s226 = ssub.s32 %s24, %s31
      %p227 = scmp.eq.s32.totalorder %s226, 0
      %s229 = sadd.s32 %s228, 1
      %s230 = scalar_select %p227, %s228, %s229
      %p233 = pneg %p227
      %p234 = scmp.eq.s32.totalorder %s24, 1
      %p235 = por %p233, %p234
      %p236 = scmp.ne.s32.totalorder %s228, %s231
      %p237 = scmp.eq.s32.totalorder %s24, 0
      %p238 = por %p236, %p237
      %p239 = scmp.ne.s32.totalorder %s228, %s231
      %p240 = scmp.eq.s32.totalorder %s29, 1
      %p241 = por %p239, %p240
      %p242 = scmp.ne.s32.totalorder %s231, %s232
      %p243 = scmp.eq.s32.totalorder %s29, 0
      %p244 = por %p242, %p243
      %p245 = scmp.ne.s32.totalorder %s231, %s232
      %p246 = scmp.eq.s32.totalorder %s30, 1
      %p247 = por %p245, %p246
      %p249 = scmp.ne.s32.totalorder %s232, %s248
      %p250 = scmp.eq.s32.totalorder %s30, 0
      %p251 = por %p249, %p250
      %p252 = scmp.le.s32.totalorder 1, %s24
      %p253 = scmp.lt.s32.totalorder %s24, 3
      %p254 = pnand %p252, %p253
      %p255 = pneg %p254
      // Predicated region
      $region9: #{tpu_custom_call.1} parent=5 // pred_check
        _
      $region10: #{tpu_custom_call.1} parent=5 // pred_check_branch
        %257 = sbr.rel (%p254) target = $region12
      $region11: #{tpu_custom_call.1} parent=5 // pred_region
        %s258 = ssub.s32 %s24, 1
        // Predicated region
        $region13: #{tpu_custom_call.1} parent=11 // pred_check
          %p259 = pneg %p71
        $region14: #{tpu_custom_call.1} parent=11 // pred_check_branch
          %261 = sbr.rel (%p259) target = $region16
        $region15: #{tpu_custom_call.1} parent=11 // pred_region
          %263 = vsyncadd [#allocation6], 0
          %s264 = sshll.u32 %s1, 4
          %s265 = int_to_ptr.hbm [resolvable:$true] %s264
          %s266 = sshll.u32 [#allocation5], 4
          %s267 = int_to_ptr.vmem [resolvable:$true] %s266
          %272 = dma.hbm_to_vmem [thread:$0]  %s265, 2048, %s267, [#allocation6], 128, 128, 8
        $region16: #{tpu_custom_call.1} parent=11 // pred_fallthru
          _
        // Predicated region
        $region17: #{tpu_custom_call.1} parent=11 // pred_check
          %p273 = pneg %p92
        $region18: #{tpu_custom_call.1} parent=11 // pred_check_branch
          %275 = sbr.rel (%p273) target = $region20
        $region19: #{tpu_custom_call.1} parent=11 // pred_region
          %277 = vsyncadd [#allocation6], 0
          %s279 = sshll.u32 %s2, 4
          %s280 = int_to_ptr.hbm [resolvable:$true] %s279
          %s281 = sshll.u32 [#allocation7], 4
          %s282 = int_to_ptr.vmem [resolvable:$true] %s281
          %284 = dma.hbm_to_vmem [thread:$0]  %s280, 32, %s282, [#allocation6]
        $region20: #{tpu_custom_call.1} parent=11 // pred_fallthru
          _
        // Predicated region
        $region21: #{tpu_custom_call.1} parent=11 // pred_check
          %p285 = pneg %p113
        $region22: #{tpu_custom_call.1} parent=11 // pred_check_branch
          %287 = sbr.rel (%p285) target = $region24
        $region23: #{tpu_custom_call.1} parent=11 // pred_region
          %289 = vsyncadd [#allocation9], 0
          %s290 = sshll.u32 %s3, 4
          %s291 = int_to_ptr.hbm [resolvable:$true] %s290
          %s292 = sshll.u32 [#allocation8], 4
          %s293 = int_to_ptr.vmem [resolvable:$true] %s292
          %298 = dma.hbm_to_vmem [thread:$0]  %s291, 8192, %s293, [#allocation9], 256, 256, 16
        $region24: #{tpu_custom_call.1} parent=11 // pred_fallthru
          _
        // Predicated region
        $region25: #{tpu_custom_call.1} parent=11 // pred_check
          %p299 = pneg %p134
        $region26: #{tpu_custom_call.1} parent=11 // pred_check_branch
          %301 = sbr.rel (%p299) target = $region28
        $region27: #{tpu_custom_call.1} parent=11 // pred_region
          %303 = vsyncadd [#allocation9], 0
          %s305 = sshll.u32 %s4, 4
          %s306 = int_to_ptr.hbm [resolvable:$true] %s305
          %s307 = sshll.u32 [#allocation10], 4
          %s308 = int_to_ptr.vmem [resolvable:$true] %s307
          %310 = dma.hbm_to_vmem [thread:$0]  %s306, 64, %s308, [#allocation9]
        $region28: #{tpu_custom_call.1} parent=11 // pred_fallthru
          _
        // Predicated region
        $region29: #{tpu_custom_call.1} parent=11 // pred_check
          %p311 = pneg %p155
        $region30: #{tpu_custom_call.1} parent=11 // pred_check_branch
          %313 = sbr.rel (%p311) target = $region32
        $region31: #{tpu_custom_call.1} parent=11 // pred_region
          %315 = vsyncadd [#allocation12], 0
          %s316 = sshll.u32 %s5, 4
          %s317 = int_to_ptr.hbm [resolvable:$true] %s316
          %s318 = sshll.u32 [#allocation11], 4
          %s319 = int_to_ptr.vmem [resolvable:$true] %s318
          %324 = dma.hbm_to_vmem [thread:$0]  %s317, 4096, %s319, [#allocation12], 64, 64, 4
        $region32: #{tpu_custom_call.1} parent=11 // pred_fallthru
          _
        // Predicated region
        $region33: #{tpu_custom_call.1} parent=11 // pred_check
          %p325 = pneg %p176
        $region34: #{tpu_custom_call.1} parent=11 // pred_check_branch
          %327 = sbr.rel (%p325) target = $region36
        $region35: #{tpu_custom_call.1} parent=11 // pred_region
          _
        $region36: #{tpu_custom_call.1} parent=11 // pred_fallthru
          _
        // Predicated region
        $region37: #{tpu_custom_call.1} parent=11 // pred_check
          %p328 = pneg %p197
        $region38: #{tpu_custom_call.1} parent=11 // pred_check_branch
          %330 = sbr.rel (%p328) target = $region40
        $region39: #{tpu_custom_call.1} parent=11 // pred_region
          %332 = vsyncadd [#allocation12], 0
          %s333 = sshll.u32 %s7, 4
          %s334 = int_to_ptr.hbm [resolvable:$true] %s333
          %s335 = sshll.u32 [#allocation13], 4
          %s336 = int_to_ptr.vmem [resolvable:$true] %s335
          %341 = dma.hbm_to_vmem [thread:$0]  %s334, 4096, %s336, [#allocation12], 256, 256, 16
        $region40: #{tpu_custom_call.1} parent=11 // pred_fallthru
          _
        // Predicated region
        $region41: #{tpu_custom_call.1} parent=11 // pred_check
          %p342 = pneg %p218
        $region42: #{tpu_custom_call.1} parent=11 // pred_check_branch
          %344 = sbr.rel (%p342) target = $region44
        $region43: #{tpu_custom_call.1} parent=11 // pred_region
          _
        $region44: #{tpu_custom_call.1} parent=11 // pred_fallthru
          _
      $region12: #{tpu_custom_call.1} parent=5 // pred_fallthru
        _
      %p345 = scmp.lt.s32.totalorder %s24, 2
      // Predicated region
      $region45: #{tpu_custom_call.1} parent=5 // pred_check
        %p346 = pneg %p345
      $region46: #{tpu_custom_call.1} parent=5 // pred_check_branch
        %348 = sbr.rel (%p346) target = $region48
      $region47: #{tpu_custom_call.1} parent=5 // pred_region
        // Predicated region
        $region49: #{tpu_custom_call.1} parent=47 // pred_check
          %p349 = pneg %p44
        $region50: #{tpu_custom_call.1} parent=47 // pred_check_branch
          %351 = sbr.rel (%p349) target = $region52
        $region51: #{tpu_custom_call.1} parent=47 // pred_region
          %s352 = sand.u32 %s34, 1
          %s353 = scalar_lea.sflag [#allocation3], %s352
          %s354 = sand.u32 %s34, 1
          %s355 = smul.addr %s354, 64
          %s356 = scalar_lea.vmem [#allocation2], %s355
          %s357 = smul.u32 16, %s24
          %359 = vsyncadd %s353, 0
          %s360 = smul.addr %s357, 4
          %s361 = scalar_lea.hbm %s0, %s360
          %s362 = sshll.u32 %s361, 4
          %s363 = int_to_ptr.hbm [resolvable:$true] %s362
          %s364 = sshll.u32 %s356, 4
          %s365 = int_to_ptr.vmem [resolvable:$true] %s364
          %370 = dma.hbm_to_vmem [thread:$0]  %s363, 1024, %s365, %s353, 64, 64, 4
        $region52: #{tpu_custom_call.1} parent=47 // pred_fallthru
          _
      $region48: #{tpu_custom_call.1} parent=5 // pred_fallthru
        _
      %p371 = scmp.le.s32.totalorder 1, %s24
      %p372 = scmp.lt.s32.totalorder %s24, 3
      %p373 = pnand %p371, %p372
      %p374 = pneg %p373
      // Predicated region
      $region53: #{tpu_custom_call.1} parent=5 // pred_check
        _
      $region54: #{tpu_custom_call.1} parent=5 // pred_check_branch
        %376 = sbr.rel (%p373) target = $region56
      $region55: #{tpu_custom_call.1} parent=5 // pred_region
        %s377 = ssub.s32 %s24, 1
        %s378 = sand.u32 %s37, 1
        %s379 = scalar_lea.sflag [#allocation3], %s378
        %s380 = sand.u32 %s37, 1
        %s381 = smul.addr %s380, 64
        %s382 = scalar_lea.vmem [#allocation2], %s381
        // Predicated region
        $region57: #{tpu_custom_call.1} parent=55 // pred_check
          %p383 = pneg %p50
        $region58: #{tpu_custom_call.1} parent=55 // pred_check_branch
          %385 = sbr.rel (%p383) target = $region60
        $region59: #{tpu_custom_call.1} parent=55 // pred_region
          %387 = dma.done %s379, 1024
        $region60: #{tpu_custom_call.1} parent=55 // pred_fallthru
          _
        // Predicated region
        $region61: #{tpu_custom_call.1} parent=55 // pred_check
          %p388 = pneg %p71
        $region62: #{tpu_custom_call.1} parent=55 // pred_check_branch
          %390 = sbr.rel (%p388) target = $region64
        $region63: #{tpu_custom_call.1} parent=55 // pred_region
          %392 = dma.done [#allocation6], 2048
        $region64: #{tpu_custom_call.1} parent=55 // pred_fallthru
          _
        // Predicated region
        $region65: #{tpu_custom_call.1} parent=55 // pred_check
          %p393 = pneg %p92
        $region66: #{tpu_custom_call.1} parent=55 // pred_check_branch
          %395 = sbr.rel (%p393) target = $region68
        $region67: #{tpu_custom_call.1} parent=55 // pred_region
          %397 = dma.done [#allocation6], 32
        $region68: #{tpu_custom_call.1} parent=55 // pred_fallthru
          _
        // Predicated region
        $region69: #{tpu_custom_call.1} parent=55 // pred_check
          %p398 = pneg %p113
        $region70: #{tpu_custom_call.1} parent=55 // pred_check_branch
          %400 = sbr.rel (%p398) target = $region72
        $region71: #{tpu_custom_call.1} parent=55 // pred_region
          %402 = dma.done [#allocation9], 8192
        $region72: #{tpu_custom_call.1} parent=55 // pred_fallthru
          _
        // Predicated region
        $region73: #{tpu_custom_call.1} parent=55 // pred_check
          %p403 = pneg %p134
        $region74: #{tpu_custom_call.1} parent=55 // pred_check_branch
          %405 = sbr.rel (%p403) target = $region76
        $region75: #{tpu_custom_call.1} parent=55 // pred_region
          %407 = dma.done [#allocation9], 64
        $region76: #{tpu_custom_call.1} parent=55 // pred_fallthru
          _
        // Predicated region
        $region77: #{tpu_custom_call.1} parent=55 // pred_check
          %p408 = pneg %p155
        $region78: #{tpu_custom_call.1} parent=55 // pred_check_branch
          %410 = sbr.rel (%p408) target = $region80
        $region79: #{tpu_custom_call.1} parent=55 // pred_region
          %412 = dma.done [#allocation12], 4096
        $region80: #{tpu_custom_call.1} parent=55 // pred_fallthru
          _
        // Predicated region
        $region81: #{tpu_custom_call.1} parent=55 // pred_check
          %p413 = pneg %p197
        $region82: #{tpu_custom_call.1} parent=55 // pred_check_branch
          %415 = sbr.rel (%p413) target = $region84
        $region83: #{tpu_custom_call.1} parent=55 // pred_region
          %417 = dma.done [#allocation12], 4096
        $region84: #{tpu_custom_call.1} parent=55 // pred_fallthru
          _
        %s418 = sand.u32 %s37, 1
        %s419 = scalar_lea.sflag [#allocation3], %s418
        %s420 = sand.u32 %s37, 1
        %s421 = smul.addr %s420, 64
        %s422 = scalar_lea.vmem [#allocation2], %s421
        %p423 = pneg %p50
        %p424 = pneg %p47
        %p425 = pneg %p71
        %p426 = pneg %p68
        %p427 = pneg %p92
        %p428 = pneg %p89
        %p429 = pneg %p113
        %p430 = pneg %p110
        %p431 = pneg %p134
        %p432 = pneg %p131
        %p433 = pneg %p155
        %p434 = pneg %p152
        %p435 = pneg %p176
        %p436 = pneg %p173
        %p437 = pneg %p197
        %p438 = pneg %p194
        %p439 = pneg %p218
        %p440 = pneg %p215
        %p441 = pneg %p244
        %p442 = pneg %p241
        %s443 = sand.u32 %s231, 1
        %s444 = scalar_lea.sflag [#allocation4], %s443
        %s445 = sand.u32 %s231, 1
        %s446 = smul.addr %s445, 512
        %s447 = scalar_lea.vmem [#allocation14], %s446
        %s448 = smul.u32 16, %s29
        %s449 = smul.u32 16, %s29
        %v450 = vld [vmem:[%s382] sm:$0xf]
        %v451 = vld [vmem:[%s382 + $0x4] sm:$0xf]
        %v452 = vld [vmem:[%s382 + $0x8] sm:$0xf]
        %v453 = vld [vmem:[%s382 + $0xc] sm:$0xf]
        %v454 = vld [vmem:[%s382 + $0x10] sm:$0xf]
        %v455 = vld [vmem:[%s382 + $0x14] sm:$0xf]
        %v456 = vld [vmem:[%s382 + $0x18] sm:$0xf]
        %v457 = vld [vmem:[%s382 + $0x1c] sm:$0xf]
        %v458 = vld [vmem:[%s382 + $0x20] sm:$0xf]
        %v459 = vld [vmem:[%s382 + $0x24] sm:$0xf]
        %v460 = vld [vmem:[%s382 + $0x28] sm:$0xf]
        %v461 = vld [vmem:[%s382 + $0x2c] sm:$0xf]
        %v462 = vld [vmem:[%s382 + $0x30] sm:$0xf]
        %v463 = vld [vmem:[%s382 + $0x34] sm:$0xf]
        %v464 = vld [vmem:[%s382 + $0x38] sm:$0xf]
        %v465 = vld [vmem:[%s382 + $0x3c] sm:$0xf]
        %v466 = vld [vmem:[#allocation5] sm:$0xff]
        %v467 = vld [vmem:[#allocation5 + $0x8] sm:$0xff]
        %v468 = vld [vmem:[#allocation5 + $0x10] sm:$0xff]
        %v469 = vld [vmem:[#allocation5 + $0x18] sm:$0xff]
        %v470 = vld [vmem:[#allocation5 + $0x20] sm:$0xff]
        %v471 = vld [vmem:[#allocation5 + $0x28] sm:$0xff]
        %v472 = vld [vmem:[#allocation5 + $0x30] sm:$0xff]
        %v473 = vld [vmem:[#allocation5 + $0x38] sm:$0xff]
        %v474 = vld [vmem:[#allocation5 + $0x40] sm:$0xff]
        %v475 = vld [vmem:[#allocation5 + $0x48] sm:$0xff]
        %v476 = vld [vmem:[#allocation5 + $0x50] sm:$0xff]
        %v477 = vld [vmem:[#allocation5 + $0x58] sm:$0xff]
        %v478 = vld [vmem:[#allocation5 + $0x60] sm:$0xff]
        %v479 = vld [vmem:[#allocation5 + $0x68] sm:$0xff]
        %v480 = vld [vmem:[#allocation5 + $0x70] sm:$0xff]
        %v481 = vld [vmem:[#allocation5 + $0x78] sm:$0xff]
        %v482 = vld [vmem:[#allocation7] sm:$0x3]
        %v484 = vperm.slane %v482, 0
        %v485 = vperm.slane %v482, 1
        %v504 = vunpack.c.l.b16 %v450
        %v505 = vunpack.c.l.b16 %v451
        %v506 = vunpack.c.l.b16 %v452
        %v507 = vunpack.c.l.b16 %v453
        %v508 = vunpack.c.l.b16 %v454
        %v509 = vunpack.c.l.b16 %v455
        %v510 = vunpack.c.l.b16 %v456
        %v511 = vunpack.c.l.b16 %v457
        %v512 = vunpack.c.l.b16 %v458
        %v513 = vunpack.c.l.b16 %v459
        %v514 = vunpack.c.l.b16 %v460
        %v515 = vunpack.c.l.b16 %v461
        %v516 = vunpack.c.l.b16 %v462
        %v517 = vunpack.c.l.b16 %v463
        %v518 = vunpack.c.l.b16 %v464
        %v519 = vunpack.c.l.b16 %v465
        %v520 = vpack.c.b16 %v505, %v504
        %v521 = vpack.c.b16 %v507, %v506
        %v522 = vpack.c.b16 %v509, %v508
        %v523 = vpack.c.b16 %v511, %v510
        %v524 = vpack.c.b16 %v513, %v512
        %v525 = vpack.c.b16 %v515, %v514
        %v526 = vpack.c.b16 %v517, %v516
        %v527 = vpack.c.b16 %v519, %v518
        %v552 = vunpack.c.l.b16 %v466
        %v553 = vunpack.c.h.b16 %v466
        %v554 = vunpack.c.l.b16 %v467
        %v555 = vunpack.c.h.b16 %v467
        %v556 = vunpack.c.l.b16 %v468
        %v557 = vunpack.c.h.b16 %v468
        %v558 = vunpack.c.l.b16 %v469
        %v559 = vunpack.c.h.b16 %v469
        %v560 = vunpack.c.l.b16 %v470
        %v561 = vunpack.c.h.b16 %v470
        %v562 = vunpack.c.l.b16 %v471
        %v563 = vunpack.c.h.b16 %v471
        %v564 = vunpack.c.l.b16 %v472
        %v565 = vunpack.c.h.b16 %v472
        %v566 = vunpack.c.l.b16 %v473
        %v567 = vunpack.c.h.b16 %v473
        %v568 = vunpack.c.l.b16 %v474
        %v569 = vunpack.c.h.b16 %v474
        %v570 = vunpack.c.l.b16 %v475
        %v571 = vunpack.c.h.b16 %v475
        %v572 = vunpack.c.l.b16 %v476
        %v573 = vunpack.c.h.b16 %v476
        %v574 = vunpack.c.l.b16 %v477
        %v575 = vunpack.c.h.b16 %v477
        %v576 = vunpack.c.l.b16 %v478
        %v577 = vunpack.c.h.b16 %v478
        %v578 = vunpack.c.l.b16 %v479
        %v579 = vunpack.c.h.b16 %v479
        %v580 = vunpack.c.l.b16 %v480
        %v581 = vunpack.c.h.b16 %v480
        %v582 = vunpack.c.l.b16 %v481
        %v583 = vunpack.c.h.b16 %v481
        %v584 = vpack.c.b16 %v554, %v552
        %v585 = vpack.c.b16 %v555, %v553
        %v586 = vpack.c.b16 %v558, %v556
        %v587 = vpack.c.b16 %v559, %v557
        %v588 = vpack.c.b16 %v562, %v560
        %v589 = vpack.c.b16 %v563, %v561
        %v590 = vpack.c.b16 %v566, %v564
        %v591 = vpack.c.b16 %v567, %v565
        %v592 = vpack.c.b16 %v570, %v568
        %v593 = vpack.c.b16 %v571, %v569
        %v594 = vpack.c.b16 %v574, %v572
        %v595 = vpack.c.b16 %v575, %v573
        %v596 = vpack.c.b16 %v578, %v576
        %v597 = vpack.c.b16 %v579, %v577
        %v598 = vpack.c.b16 %v582, %v580
        %v599 = vpack.c.b16 %v583, %v581
        %616 = vmatpush.bf16.msra.mxu0 %v598
        %617 = vmatpush.bf16.msra.mxu0 %v596
        %618 = vmatpush.bf16.msra.mxu0 %v594
        %619 = vmatpush.bf16.msra.mxu0 %v592
        %620 = vmatpush.bf16.msra.mxu0 %v590
        %621 = vmatpush.bf16.msra.mxu0 %v588
        %622 = vmatpush.bf16.msra.mxu0 %v586
        %623 = vmatpush.bf16.msra.mxu0 %v584
        %624 = vmatmul.bf16.gmra.mxu0 %v520
        %v625 = vpop.f32.mrf.mxu0
        %v626 = vadd.f32 %v484, %v625
        %v627 = vpop.f32.mrf.mxu0
        %v628 = vadd.f32 %v484, %v627
        %629 = vmatmul.bf16.gmra.mxu0 %v521
        %v630 = vpop.f32.mrf.mxu0
        %v631 = vadd.f32 %v484, %v630
        %v632 = vpop.f32.mrf.mxu0
        %v633 = vadd.f32 %v484, %v632
        %634 = vmatmul.bf16.gmra.mxu0 %v522
        %v635 = vpop.f32.mrf.mxu0
        %v636 = vadd.f32 %v484, %v635
        %v637 = vpop.f32.mrf.mxu0
        %v638 = vadd.f32 %v484, %v637
        %639 = vmatmul.bf16.gmra.mxu0 %v523
        %v640 = vpop.f32.mrf.mxu0
        %v641 = vadd.f32 %v484, %v640
        %v642 = vpop.f32.mrf.mxu0
        %v643 = vadd.f32 %v484, %v642
        %644 = vmatmul.bf16.gmra.mxu0 %v524
        %v645 = vpop.f32.mrf.mxu0
        %v646 = vadd.f32 %v484, %v645
        %v647 = vpop.f32.mrf.mxu0
        %v648 = vadd.f32 %v484, %v647
        %649 = vmatmul.bf16.gmra.mxu0 %v525
        %v650 = vpop.f32.mrf.mxu0
        %v651 = vadd.f32 %v484, %v650
        %v652 = vpop.f32.mrf.mxu0
        %v653 = vadd.f32 %v484, %v652
        %654 = vmatmul.bf16.gmra.mxu0 %v526
        %v655 = vpop.f32.mrf.mxu0
        %v656 = vadd.f32 %v484, %v655
        %v657 = vpop.f32.mrf.mxu0
        %v658 = vadd.f32 %v484, %v657
        %659 = vmatmul.bf16.gmra.mxu0 %v527
        %v660 = vpop.f32.mrf.mxu0
        %v661 = vadd.f32 %v484, %v660
        %v662 = vpop.f32.mrf.mxu0
        %v663 = vadd.f32 %v484, %v662
        %664 = vdwg.mxu0
        %665 = vmatpush.bf16.msra.mxu0 %v599
        %666 = vmatpush.bf16.msra.mxu0 %v597
        %667 = vmatpush.bf16.msra.mxu0 %v595
        %668 = vmatpush.bf16.msra.mxu0 %v593
        %669 = vmatpush.bf16.msra.mxu0 %v591
        %670 = vmatpush.bf16.msra.mxu0 %v589
        %671 = vmatpush.bf16.msra.mxu0 %v587
        %672 = vmatpush.bf16.msra.mxu0 %v585
        %673 = vmatmul.bf16.gmra.mxu0 %v520
        %v674 = vpop.f32.mrf.mxu0
        %v675 = vadd.f32 %v485, %v674
        %v676 = vpop.f32.mrf.mxu0
        %v677 = vadd.f32 %v485, %v676
        %678 = vmatmul.bf16.gmra.mxu0 %v521
        %v679 = vpop.f32.mrf.mxu0
        %v680 = vadd.f32 %v485, %v679
        %v681 = vpop.f32.mrf.mxu0
        %v682 = vadd.f32 %v485, %v681
        %683 = vmatmul.bf16.gmra.mxu0 %v522
        %v684 = vpop.f32.mrf.mxu0
        %v685 = vadd.f32 %v485, %v684
        %v686 = vpop.f32.mrf.mxu0
        %v687 = vadd.f32 %v485, %v686
        %688 = vmatmul.bf16.gmra.mxu0 %v523
        %v689 = vpop.f32.mrf.mxu0
        %v690 = vadd.f32 %v485, %v689
        %v691 = vpop.f32.mrf.mxu0
        %v692 = vadd.f32 %v485, %v691
        %693 = vmatmul.bf16.gmra.mxu0 %v524
        %v694 = vpop.f32.mrf.mxu0
        %v695 = vadd.f32 %v485, %v694
        %v696 = vpop.f32.mrf.mxu0
        %v697 = vadd.f32 %v485, %v696
        %698 = vmatmul.bf16.gmra.mxu0 %v525
        %v699 = vpop.f32.mrf.mxu0
        %v700 = vadd.f32 %v485, %v699
        %v701 = vpop.f32.mrf.mxu0
        %v702 = vadd.f32 %v485, %v701
        %703 = vmatmul.bf16.gmra.mxu0 %v526
        %v704 = vpop.f32.mrf.mxu0
        %v705 = vadd.f32 %v485, %v704
        %v706 = vpop.f32.mrf.mxu0
        %v707 = vadd.f32 %v485, %v706
        %708 = vmatmul.bf16.gmra.mxu0 %v527
        %v709 = vpop.f32.mrf.mxu0
        %v710 = vadd.f32 %v485, %v709
        %v711 = vpop.f32.mrf.mxu0
        %v712 = vadd.f32 %v485, %v711
        %713 = vdwg.mxu0
        %v714 = vmax.f32 %v626, 0.0
        %v715 = vmax.f32 %v675, 0.0
        %v716 = vmax.f32 %v628, 0.0
        %v717 = vmax.f32 %v677, 0.0
        %v718 = vmax.f32 %v631, 0.0
        %v719 = vmax.f32 %v680, 0.0
        %v720 = vmax.f32 %v633, 0.0
        %v721 = vmax.f32 %v682, 0.0
        %v722 = vmax.f32 %v636, 0.0
        %v723 = vmax.f32 %v685, 0.0
        %v724 = vmax.f32 %v638, 0.0
        %v725 = vmax.f32 %v687, 0.0
        %v726 = vmax.f32 %v641, 0.0
        %v727 = vmax.f32 %v690, 0.0
        %v728 = vmax.f32 %v643, 0.0
        %v729 = vmax.f32 %v692, 0.0
        %v730 = vmax.f32 %v646, 0.0
        %v731 = vmax.f32 %v695, 0.0
        %v732 = vmax.f32 %v648, 0.0
        %v733 = vmax.f32 %v697, 0.0
        %v734 = vmax.f32 %v651, 0.0
        %v735 = vmax.f32 %v700, 0.0
        %v736 = vmax.f32 %v653, 0.0
        %v737 = vmax.f32 %v702, 0.0
        %v738 = vmax.f32 %v656, 0.0
        %v739 = vmax.f32 %v705, 0.0
        %v740 = vmax.f32 %v658, 0.0
        %v741 = vmax.f32 %v707, 0.0
        %v742 = vmax.f32 %v661, 0.0
        %v743 = vmax.f32 %v710, 0.0
        %v744 = vmax.f32 %v663, 0.0
        %v745 = vmax.f32 %v712, 0.0
        %v746 = vpack.c.bf16 %v716, %v714
        %v747 = vpack.c.bf16 %v717, %v715
        %v748 = vpack.c.bf16 %v720, %v718
        %v749 = vpack.c.bf16 %v721, %v719
        %v750 = vpack.c.bf16 %v724, %v722
        %v751 = vpack.c.bf16 %v725, %v723
        %v752 = vpack.c.bf16 %v728, %v726
        %v753 = vpack.c.bf16 %v729, %v727
        %v754 = vpack.c.bf16 %v732, %v730
        %v755 = vpack.c.bf16 %v733, %v731
        %v756 = vpack.c.bf16 %v736, %v734
        %v757 = vpack.c.bf16 %v737, %v735
        %v758 = vpack.c.bf16 %v740, %v738
        %v759 = vpack.c.bf16 %v741, %v739
        %v760 = vpack.c.bf16 %v744, %v742
        %v761 = vpack.c.bf16 %v745, %v743
        %v762 = vld [vmem:[#allocation8] sm:$0xff]
        %v763 = vld [vmem:[#allocation8 + $0x8] sm:$0xff]
        %v764 = vld [vmem:[#allocation8 + $0x10] sm:$0xff]
        %v765 = vld [vmem:[#allocation8 + $0x18] sm:$0xff]
        %v766 = vld [vmem:[#allocation8 + $0x20] sm:$0xff]
        %v767 = vld [vmem:[#allocation8 + $0x28] sm:$0xff]
        %v768 = vld [vmem:[#allocation8 + $0x30] sm:$0xff]
        %v769 = vld [vmem:[#allocation8 + $0x38] sm:$0xff]
        %v770 = vld [vmem:[#allocation8 + $0x40] sm:$0xff]
        %v771 = vld [vmem:[#allocation8 + $0x48] sm:$0xff]
        %v772 = vld [vmem:[#allocation8 + $0x50] sm:$0xff]
        %v773 = vld [vmem:[#allocation8 + $0x58] sm:$0xff]
        %v774 = vld [vmem:[#allocation8 + $0x60] sm:$0xff]
        %v775 = vld [vmem:[#allocation8 + $0x68] sm:$0xff]
        %v776 = vld [vmem:[#allocation8 + $0x70] sm:$0xff]
        %v777 = vld [vmem:[#allocation8 + $0x78] sm:$0xff]
        %v778 = vld [vmem:[#allocation8 + $0x80] sm:$0xff]
        %v779 = vld [vmem:[#allocation8 + $0x88] sm:$0xff]
        %v780 = vld [vmem:[#allocation8 + $0x90] sm:$0xff]
        %v781 = vld [vmem:[#allocation8 + $0x98] sm:$0xff]
        %v782 = vld [vmem:[#allocation8 + $0xa0] sm:$0xff]
        %v783 = vld [vmem:[#allocation8 + $0xa8] sm:$0xff]
        %v784 = vld [vmem:[#allocation8 + $0xb0] sm:$0xff]
        %v785 = vld [vmem:[#allocation8 + $0xb8] sm:$0xff]
        %v786 = vld [vmem:[#allocation8 + $0xc0] sm:$0xff]
        %v787 = vld [vmem:[#allocation8 + $0xc8] sm:$0xff]
        %v788 = vld [vmem:[#allocation8 + $0xd0] sm:$0xff]
        %v789 = vld [vmem:[#allocation8 + $0xd8] sm:$0xff]
        %v790 = vld [vmem:[#allocation8 + $0xe0] sm:$0xff]
        %v791 = vld [vmem:[#allocation8 + $0xe8] sm:$0xff]
        %v792 = vld [vmem:[#allocation8 + $0xf0] sm:$0xff]
        %v793 = vld [vmem:[#allocation8 + $0xf8] sm:$0xff]
        %v794 = vld [vmem:[#allocation8 + $0x100] sm:$0xff]
        %v795 = vld [vmem:[#allocation8 + $0x108] sm:$0xff]
        %v796 = vld [vmem:[#allocation8 + $0x110] sm:$0xff]
        %v797 = vld [vmem:[#allocation8 + $0x118] sm:$0xff]
        %v798 = vld [vmem:[#allocation8 + $0x120] sm:$0xff]
        %v799 = vld [vmem:[#allocation8 + $0x128] sm:$0xff]
        %v800 = vld [vmem:[#allocation8 + $0x130] sm:$0xff]
        %v801 = vld [vmem:[#allocation8 + $0x138] sm:$0xff]
        %v802 = vld [vmem:[#allocation8 + $0x140] sm:$0xff]
        %v803 = vld [vmem:[#allocation8 + $0x148] sm:$0xff]
        %v804 = vld [vmem:[#allocation8 + $0x150] sm:$0xff]
        %v805 = vld [vmem:[#allocation8 + $0x158] sm:$0xff]
        %v806 = vld [vmem:[#allocation8 + $0x160] sm:$0xff]
        %v807 = vld [vmem:[#allocation8 + $0x168] sm:$0xff]
        %v808 = vld [vmem:[#allocation8 + $0x170] sm:$0xff]
        %v809 = vld [vmem:[#allocation8 + $0x178] sm:$0xff]
        %v810 = vld [vmem:[#allocation8 + $0x180] sm:$0xff]
        %v811 = vld [vmem:[#allocation8 + $0x188] sm:$0xff]
        %v812 = vld [vmem:[#allocation8 + $0x190] sm:$0xff]
        %v813 = vld [vmem:[#allocation8 + $0x198] sm:$0xff]
        %v814 = vld [vmem:[#allocation8 + $0x1a0] sm:$0xff]
        %v815 = vld [vmem:[#allocation8 + $0x1a8] sm:$0xff]
        %v816 = vld [vmem:[#allocation8 + $0x1b0] sm:$0xff]
        %v817 = vld [vmem:[#allocation8 + $0x1b8] sm:$0xff]
        %v818 = vld [vmem:[#allocation8 + $0x1c0] sm:$0xff]
        %v819 = vld [vmem:[#allocation8 + $0x1c8] sm:$0xff]
        %v820 = vld [vmem:[#allocation8 + $0x1d0] sm:$0xff]
        %v821 = vld [vmem:[#allocation8 + $0x1d8] sm:$0xff]
        %v822 = vld [vmem:[#allocation8 + $0x1e0] sm:$0xff]
        %v823 = vld [vmem:[#allocation8 + $0x1e8] sm:$0xff]
        %v824 = vld [vmem:[#allocation8 + $0x1f0] sm:$0xff]
        %v825 = vld [vmem:[#allocation8 + $0x1f8] sm:$0xff]
        %v826 = vld [vmem:[#allocation10] sm:$0xf]
        %v828 = vperm.slane %v826, 0
        %v829 = vperm.slane %v826, 1
        %v830 = vperm.slane %v826, 2
        %v831 = vperm.slane %v826, 3
        %v900 = vunpack.c.l.b16 %v762
        %v901 = vunpack.c.h.b16 %v762
        %v902 = vunpack.c.l.b16 %v763
        %v903 = vunpack.c.h.b16 %v763
        %v904 = vunpack.c.l.b16 %v764
        %v905 = vunpack.c.h.b16 %v764
        %v906 = vunpack.c.l.b16 %v765
        %v907 = vunpack.c.h.b16 %v765
        %v908 = vunpack.c.l.b16 %v766
        %v909 = vunpack.c.h.b16 %v766
        %v910 = vunpack.c.l.b16 %v767
        %v911 = vunpack.c.h.b16 %v767
        %v912 = vunpack.c.l.b16 %v768
        %v913 = vunpack.c.h.b16 %v768
        %v914 = vunpack.c.l.b16 %v769
        %v915 = vunpack.c.h.b16 %v769
        %v916 = vunpack.c.l.b16 %v770
        %v917 = vunpack.c.h.b16 %v770
        %v918 = vunpack.c.l.b16 %v771
        %v919 = vunpack.c.h.b16 %v771
        %v920 = vunpack.c.l.b16 %v772
        %v921 = vunpack.c.h.b16 %v772
        %v922 = vunpack.c.l.b16 %v773
        %v923 = vunpack.c.h.b16 %v773
        %v924 = vunpack.c.l.b16 %v774
        %v925 = vunpack.c.h.b16 %v774
        %v926 = vunpack.c.l.b16 %v775
        %v927 = vunpack.c.h.b16 %v775
        %v928 = vunpack.c.l.b16 %v776
        %v929 = vunpack.c.h.b16 %v776
        %v930 = vunpack.c.l.b16 %v777
        %v931 = vunpack.c.h.b16 %v777
        %v932 = vunpack.c.l.b16 %v778
        %v933 = vunpack.c.h.b16 %v778
        %v934 = vunpack.c.l.b16 %v779
        %v935 = vunpack.c.h.b16 %v779
        %v936 = vunpack.c.l.b16 %v780
        %v937 = vunpack.c.h.b16 %v780
        %v938 = vunpack.c.l.b16 %v781
        %v939 = vunpack.c.h.b16 %v781
        %v940 = vunpack.c.l.b16 %v782
        %v941 = vunpack.c.h.b16 %v782
        %v942 = vunpack.c.l.b16 %v783
        %v943 = vunpack.c.h.b16 %v783
        %v944 = vunpack.c.l.b16 %v784
        %v945 = vunpack.c.h.b16 %v784
        %v946 = vunpack.c.l.b16 %v785
        %v947 = vunpack.c.h.b16 %v785
        %v948 = vunpack.c.l.b16 %v786
        %v949 = vunpack.c.h.b16 %v786
        %v950 = vunpack.c.l.b16 %v787
        %v951 = vunpack.c.h.b16 %v787
        %v952 = vunpack.c.l.b16 %v788
        %v953 = vunpack.c.h.b16 %v788
        %v954 = vunpack.c.l.b16 %v789
        %v955 = vunpack.c.h.b16 %v789
        %v956 = vunpack.c.l.b16 %v790
        %v957 = vunpack.c.h.b16 %v790
        %v958 = vunpack.c.l.b16 %v791
        %v959 = vunpack.c.h.b16 %v791
        %v960 = vunpack.c.l.b16 %v792
        %v961 = vunpack.c.h.b16 %v792
        %v962 = vunpack.c.l.b16 %v793
        %v963 = vunpack.c.h.b16 %v793
        %v964 = vunpack.c.l.b16 %v794
        %v965 = vunpack.c.h.b16 %v794
        %v966 = vunpack.c.l.b16 %v795
        %v967 = vunpack.c.h.b16 %v795
        %v968 = vunpack.c.l.b16 %v796
        %v969 = vunpack.c.h.b16 %v796
        %v970 = vunpack.c.l.b16 %v797
        %v971 = vunpack.c.h.b16 %v797
        %v972 = vunpack.c.l.b16 %v798
        %v973 = vunpack.c.h.b16 %v798
        %v974 = vunpack.c.l.b16 %v799
        %v975 = vunpack.c.h.b16 %v799
        %v976 = vunpack.c.l.b16 %v800
        %v977 = vunpack.c.h.b16 %v800
        %v978 = vunpack.c.l.b16 %v801
        %v979 = vunpack.c.h.b16 %v801
        %v980 = vunpack.c.l.b16 %v802
        %v981 = vunpack.c.h.b16 %v802
        %v982 = vunpack.c.l.b16 %v803
        %v983 = vunpack.c.h.b16 %v803
        %v984 = vunpack.c.l.b16 %v804
        %v985 = vunpack.c.h.b16 %v804
        %v986 = vunpack.c.l.b16 %v805
        %v987 = vunpack.c.h.b16 %v805
        %v988 = vunpack.c.l.b16 %v806
        %v989 = vunpack.c.h.b16 %v806
        %v990 = vunpack.c.l.b16 %v807
        %v991 = vunpack.c.h.b16 %v807
        %v992 = vunpack.c.l.b16 %v808
        %v993 = vunpack.c.h.b16 %v808
        %v994 = vunpack.c.l.b16 %v809
        %v995 = vunpack.c.h.b16 %v809
        %v996 = vunpack.c.l.b16 %v810
        %v997 = vunpack.c.h.b16 %v810
        %v998 = vunpack.c.l.b16 %v811
        %v999 = vunpack.c.h.b16 %v811
        %v1000 = vunpack.c.l.b16 %v812
        %v1001 = vunpack.c.h.b16 %v812
        %v1002 = vunpack.c.l.b16 %v813
        %v1003 = vunpack.c.h.b16 %v813
        %v1004 = vunpack.c.l.b16 %v814
        %v1005 = vunpack.c.h.b16 %v814
        %v1006 = vunpack.c.l.b16 %v815
        %v1007 = vunpack.c.h.b16 %v815
        %v1008 = vunpack.c.l.b16 %v816
        %v1009 = vunpack.c.h.b16 %v816
        %v1010 = vunpack.c.l.b16 %v817
        %v1011 = vunpack.c.h.b16 %v817
        %v1012 = vunpack.c.l.b16 %v818
        %v1013 = vunpack.c.h.b16 %v818
        %v1014 = vunpack.c.l.b16 %v819
        %v1015 = vunpack.c.h.b16 %v819
        %v1016 = vunpack.c.l.b16 %v820
        %v1017 = vunpack.c.h.b16 %v820
        %v1018 = vunpack.c.l.b16 %v821
        %v1019 = vunpack.c.h.b16 %v821
        %v1020 = vunpack.c.l.b16 %v822
        %v1021 = vunpack.c.h.b16 %v822
        %v1022 = vunpack.c.l.b16 %v823
        %v1023 = vunpack.c.h.b16 %v823
        %v1024 = vunpack.c.l.b16 %v824
        %v1025 = vunpack.c.h.b16 %v824
        %v1026 = vunpack.c.l.b16 %v825
        %v1027 = vunpack.c.h.b16 %v825
        %v1028 = vpack.c.b16 %v904, %v900
        %v1029 = vpack.c.b16 %v905, %v901
        %v1030 = vpack.c.b16 %v906, %v902
        %v1031 = vpack.c.b16 %v907, %v903
        %v1032 = vpack.c.b16 %v912, %v908
        %v1033 = vpack.c.b16 %v913, %v909
        %v1034 = vpack.c.b16 %v914, %v910
        %v1035 = vpack.c.b16 %v915, %v911
        %v1036 = vpack.c.b16 %v920, %v916
        %v1037 = vpack.c.b16 %v921, %v917
        %v1038 = vpack.c.b16 %v922, %v918
        %v1039 = vpack.c.b16 %v923, %v919
        %v1040 = vpack.c.b16 %v928, %v924
        %v1041 = vpack.c.b16 %v929, %v925
        %v1042 = vpack.c.b16 %v930, %v926
        %v1043 = vpack.c.b16 %v931, %v927
        %v1044 = vpack.c.b16 %v936, %v932
        %v1045 = vpack.c.b16 %v937, %v933
        %v1046 = vpack.c.b16 %v938, %v934
        %v1047 = vpack.c.b16 %v939, %v935
        %v1048 = vpack.c.b16 %v944, %v940
        %v1049 = vpack.c.b16 %v945, %v941
        %v1050 = vpack.c.b16 %v946, %v942
        %v1051 = vpack.c.b16 %v947, %v943
        %v1052 = vpack.c.b16 %v952, %v948
        %v1053 = vpack.c.b16 %v953, %v949
        %v1054 = vpack.c.b16 %v954, %v950
        %v1055 = vpack.c.b16 %v955, %v951
        %v1056 = vpack.c.b16 %v960, %v956
        %v1057 = vpack.c.b16 %v961, %v957
        %v1058 = vpack.c.b16 %v962, %v958
        %v1059 = vpack.c.b16 %v963, %v959
        %v1060 = vpack.c.b16 %v968, %v964
        %v1061 = vpack.c.b16 %v969, %v965
        %v1062 = vpack.c.b16 %v970, %v966
        %v1063 = vpack.c.b16 %v971, %v967
        %v1064 = vpack.c.b16 %v976, %v972
        %v1065 = vpack.c.b16 %v977, %v973
        %v1066 = vpack.c.b16 %v978, %v974
        %v1067 = vpack.c.b16 %v979, %v975
        %v1068 = vpack.c.b16 %v984, %v980
        %v1069 = vpack.c.b16 %v985, %v981
        %v1070 = vpack.c.b16 %v986, %v982
        %v1071 = vpack.c.b16 %v987, %v983
        %v1072 = vpack.c.b16 %v992, %v988
        %v1073 = vpack.c.b16 %v993, %v989
        %v1074 = vpack.c.b16 %v994, %v990
        %v1075 = vpack.c.b16 %v995, %v991
        %v1076 = vpack.c.b16 %v1000, %v996
        %v1077 = vpack.c.b16 %v1001, %v997
        %v1078 = vpack.c.b16 %v1002, %v998
        %v1079 = vpack.c.b16 %v1003, %v999
        %v1080 = vpack.c.b16 %v1008, %v1004
        %v1081 = vpack.c.b16 %v1009, %v1005
        %v1082 = vpack.c.b16 %v1010, %v1006
        %v1083 = vpack.c.b16 %v1011, %v1007
        %v1084 = vpack.c.b16 %v1016, %v1012
        %v1085 = vpack.c.b16 %v1017, %v1013
        %v1086 = vpack.c.b16 %v1018, %v1014
        %v1087 = vpack.c.b16 %v1019, %v1015
        %v1088 = vpack.c.b16 %v1024, %v1020
        %v1089 = vpack.c.b16 %v1025, %v1021
        %v1090 = vpack.c.b16 %v1026, %v1022
        %v1091 = vpack.c.b16 %v1027, %v1023
        %1156 = vmatpush.bf16.msra.mxu0 %v1056
        %1157 = vmatpush.bf16.msra.mxu0 %v1052
        %1158 = vmatpush.bf16.msra.mxu0 %v1048
        %1159 = vmatpush.bf16.msra.mxu0 %v1044
        %1160 = vmatpush.bf16.msra.mxu0 %v1040
        %1161 = vmatpush.bf16.msra.mxu0 %v1036
        %1162 = vmatpush.bf16.msra.mxu0 %v1032
        %1163 = vmatpush.bf16.msra.mxu0 %v1028
        %1164 = vmatmul.bf16.gmra.mxu0 %v746
        %v1165 = vpop.f32.mrf.mxu0
        %v1166 = vadd.f32 %v828, %v1165
        %v1167 = vpop.f32.mrf.mxu0
        %v1168 = vadd.f32 %v828, %v1167
        %1169 = vmatmul.bf16.gmra.mxu0 %v748
        %v1170 = vpop.f32.mrf.mxu0
        %v1171 = vadd.f32 %v828, %v1170
        %v1172 = vpop.f32.mrf.mxu0
        %v1173 = vadd.f32 %v828, %v1172
        %1174 = vmatmul.bf16.gmra.mxu0 %v750
        %v1175 = vpop.f32.mrf.mxu0
        %v1176 = vadd.f32 %v828, %v1175
        %v1177 = vpop.f32.mrf.mxu0
        %v1178 = vadd.f32 %v828, %v1177
        %1179 = vmatmul.bf16.gmra.mxu0 %v752
        %v1180 = vpop.f32.mrf.mxu0
        %v1181 = vadd.f32 %v828, %v1180
        %v1182 = vpop.f32.mrf.mxu0
        %v1183 = vadd.f32 %v828, %v1182
        %1184 = vmatmul.bf16.gmra.mxu0 %v754
        %v1185 = vpop.f32.mrf.mxu0
        %v1186 = vadd.f32 %v828, %v1185
        %v1187 = vpop.f32.mrf.mxu0
        %v1188 = vadd.f32 %v828, %v1187
        %1189 = vmatmul.bf16.gmra.mxu0 %v756
        %v1190 = vpop.f32.mrf.mxu0
        %v1191 = vadd.f32 %v828, %v1190
        %v1192 = vpop.f32.mrf.mxu0
        %v1193 = vadd.f32 %v828, %v1192
        %1194 = vmatmul.bf16.gmra.mxu0 %v758
        %v1195 = vpop.f32.mrf.mxu0
        %v1196 = vadd.f32 %v828, %v1195
        %v1197 = vpop.f32.mrf.mxu0
        %v1198 = vadd.f32 %v828, %v1197
        %1199 = vmatmul.bf16.gmra.mxu0 %v760
        %v1200 = vpop.f32.mrf.mxu0
        %v1201 = vadd.f32 %v828, %v1200
        %v1202 = vpop.f32.mrf.mxu0
        %v1203 = vadd.f32 %v828, %v1202
        %1204 = vdwg.mxu0
        %1205 = vmatpush.bf16.msra.mxu0 %v1088
        %1206 = vmatpush.bf16.msra.mxu0 %v1084
        %1207 = vmatpush.bf16.msra.mxu0 %v1080
        %1208 = vmatpush.bf16.msra.mxu0 %v1076
        %1209 = vmatpush.bf16.msra.mxu0 %v1072
        %1210 = vmatpush.bf16.msra.mxu0 %v1068
        %1211 = vmatpush.bf16.msra.mxu0 %v1064
        %1212 = vmatpush.bf16.msra.mxu0 %v1060
        %1213 = vmatmul.bf16.gmra.mxu0 %v747
        %v1214 = vpop.f32.mrf.mxu0
        %v1215 = vadd.f32 %v1166, %v1214
        %v1216 = vpop.f32.mrf.mxu0
        %v1217 = vadd.f32 %v1168, %v1216
        %1218 = vmatmul.bf16.gmra.mxu0 %v749
        %v1219 = vpop.f32.mrf.mxu0
        %v1220 = vadd.f32 %v1171, %v1219
        %v1221 = vpop.f32.mrf.mxu0
        %v1222 = vadd.f32 %v1173, %v1221
        %1223 = vmatmul.bf16.gmra.mxu0 %v751
        %v1224 = vpop.f32.mrf.mxu0
        %v1225 = vadd.f32 %v1176, %v1224
        %v1226 = vpop.f32.mrf.mxu0
        %v1227 = vadd.f32 %v1178, %v1226
        %1228 = vmatmul.bf16.gmra.mxu0 %v753
        %v1229 = vpop.f32.mrf.mxu0
        %v1230 = vadd.f32 %v1181, %v1229
        %v1231 = vpop.f32.mrf.mxu0
        %v1232 = vadd.f32 %v1183, %v1231
        %1233 = vmatmul.bf16.gmra.mxu0 %v755
        %v1234 = vpop.f32.mrf.mxu0
        %v1235 = vadd.f32 %v1186, %v1234
        %v1236 = vpop.f32.mrf.mxu0
        %v1237 = vadd.f32 %v1188, %v1236
        %1238 = vmatmul.bf16.gmra.mxu0 %v757
        %v1239 = vpop.f32.mrf.mxu0
        %v1240 = vadd.f32 %v1191, %v1239
        %v1241 = vpop.f32.mrf.mxu0
        %v1242 = vadd.f32 %v1193, %v1241
        %1243 = vmatmul.bf16.gmra.mxu0 %v759
        %v1244 = vpop.f32.mrf.mxu0
        %v1245 = vadd.f32 %v1196, %v1244
        %v1246 = vpop.f32.mrf.mxu0
        %v1247 = vadd.f32 %v1198, %v1246
        %1248 = vmatmul.bf16.gmra.mxu0 %v761
        %v1249 = vpop.f32.mrf.mxu0
        %v1250 = vadd.f32 %v1201, %v1249
        %v1251 = vpop.f32.mrf.mxu0
        %v1252 = vadd.f32 %v1203, %v1251
        %1253 = vdwg.mxu0
        %1254 = vmatpush.bf16.msra.mxu0 %v1057
        %1255 = vmatpush.bf16.msra.mxu0 %v1053
        %1256 = vmatpush.bf16.msra.mxu0 %v1049
        %1257 = vmatpush.bf16.msra.mxu0 %v1045
        %1258 = vmatpush.bf16.msra.mxu0 %v1041
        %1259 = vmatpush.bf16.msra.mxu0 %v1037
        %1260 = vmatpush.bf16.msra.mxu0 %v1033
        %1261 = vmatpush.bf16.msra.mxu0 %v1029
        %1262 = vmatmul.bf16.gmra.mxu0 %v746
        %v1263 = vpop.f32.mrf.mxu0
        %v1264 = vadd.f32 %v829, %v1263
        %v1265 = vpop.f32.mrf.mxu0
        %v1266 = vadd.f32 %v829, %v1265
        %1267 = vmatmul.bf16.gmra.mxu0 %v748
        %v1268 = vpop.f32.mrf.mxu0
        %v1269 = vadd.f32 %v829, %v1268
        %v1270 = vpop.f32.mrf.mxu0
        %v1271 = vadd.f32 %v829, %v1270
        %1272 = vmatmul.bf16.gmra.mxu0 %v750
        %v1273 = vpop.f32.mrf.mxu0
        %v1274 = vadd.f32 %v829, %v1273
        %v1275 = vpop.f32.mrf.mxu0
        %v1276 = vadd.f32 %v829, %v1275
        %1277 = vmatmul.bf16.gmra.mxu0 %v752
        %v1278 = vpop.f32.mrf.mxu0
        %v1279 = vadd.f32 %v829, %v1278
        %v1280 = vpop.f32.mrf.mxu0
        %v1281 = vadd.f32 %v829, %v1280
        %1282 = vmatmul.bf16.gmra.mxu0 %v754
        %v1283 = vpop.f32.mrf.mxu0
        %v1284 = vadd.f32 %v829, %v1283
        %v1285 = vpop.f32.mrf.mxu0
        %v1286 = vadd.f32 %v829, %v1285
        %1287 = vmatmul.bf16.gmra.mxu0 %v756
        %v1288 = vpop.f32.mrf.mxu0
        %v1289 = vadd.f32 %v829, %v1288
        %v1290 = vpop.f32.mrf.mxu0
        %v1291 = vadd.f32 %v829, %v1290
        %1292 = vmatmul.bf16.gmra.mxu0 %v758
        %v1293 = vpop.f32.mrf.mxu0
        %v1294 = vadd.f32 %v829, %v1293
        %v1295 = vpop.f32.mrf.mxu0
        %v1296 = vadd.f32 %v829, %v1295
        %1297 = vmatmul.bf16.gmra.mxu0 %v760
        %v1298 = vpop.f32.mrf.mxu0
        %v1299 = vadd.f32 %v829, %v1298
        %v1300 = vpop.f32.mrf.mxu0
        %v1301 = vadd.f32 %v829, %v1300
        %1302 = vdwg.mxu0
        %1303 = vmatpush.bf16.msra.mxu0 %v1089
        %1304 = vmatpush.bf16.msra.mxu0 %v1085
        %1305 = vmatpush.bf16.msra.mxu0 %v1081
        %1306 = vmatpush.bf16.msra.mxu0 %v1077
        %1307 = vmatpush.bf16.msra.mxu0 %v1073
        %1308 = vmatpush.bf16.msra.mxu0 %v1069
        %1309 = vmatpush.bf16.msra.mxu0 %v1065
        %1310 = vmatpush.bf16.msra.mxu0 %v1061
        %1311 = vmatmul.bf16.gmra.mxu0 %v747
        %v1312 = vpop.f32.mrf.mxu0
        %v1313 = vadd.f32 %v1264, %v1312
        %v1314 = vpop.f32.mrf.mxu0
        %v1315 = vadd.f32 %v1266, %v1314
        %1316 = vmatmul.bf16.gmra.mxu0 %v749
        %v1317 = vpop.f32.mrf.mxu0
        %v1318 = vadd.f32 %v1269, %v1317
        %v1319 = vpop.f32.mrf.mxu0
        %v1320 = vadd.f32 %v1271, %v1319
        %1321 = vmatmul.bf16.gmra.mxu0 %v751
        %v1322 = vpop.f32.mrf.mxu0
        %v1323 = vadd.f32 %v1274, %v1322
        %v1324 = vpop.f32.mrf.mxu0
        %v1325 = vadd.f32 %v1276, %v1324
        %1326 = vmatmul.bf16.gmra.mxu0 %v753
        %v1327 = vpop.f32.mrf.mxu0
        %v1328 = vadd.f32 %v1279, %v1327
        %v1329 = vpop.f32.mrf.mxu0
        %v1330 = vadd.f32 %v1281, %v1329
        %1331 = vmatmul.bf16.gmra.mxu0 %v755
        %v1332 = vpop.f32.mrf.mxu0
        %v1333 = vadd.f32 %v1284, %v1332
        %v1334 = vpop.f32.mrf.mxu0
        %v1335 = vadd.f32 %v1286, %v1334
        %1336 = vmatmul.bf16.gmra.mxu0 %v757
        %v1337 = vpop.f32.mrf.mxu0
        %v1338 = vadd.f32 %v1289, %v1337
        %v1339 = vpop.f32.mrf.mxu0
        %v1340 = vadd.f32 %v1291, %v1339
        %1341 = vmatmul.bf16.gmra.mxu0 %v759
        %v1342 = vpop.f32.mrf.mxu0
        %v1343 = vadd.f32 %v1294, %v1342
        %v1344 = vpop.f32.mrf.mxu0
        %v1345 = vadd.f32 %v1296, %v1344
        %1346 = vmatmul.bf16.gmra.mxu0 %v761
        %v1347 = vpop.f32.mrf.mxu0
        %v1348 = vadd.f32 %v1299, %v1347
        %v1349 = vpop.f32.mrf.mxu0
        %v1350 = vadd.f32 %v1301, %v1349
        %1351 = vdwg.mxu0
        %1352 = vmatpush.bf16.msra.mxu0 %v1058
        %1353 = vmatpush.bf16.msra.mxu0 %v1054
        %1354 = vmatpush.bf16.msra.mxu0 %v1050
        %1355 = vmatpush.bf16.msra.mxu0 %v1046
        %1356 = vmatpush.bf16.msra.mxu0 %v1042
        %1357 = vmatpush.bf16.msra.mxu0 %v1038
        %1358 = vmatpush.bf16.msra.mxu0 %v1034
        %1359 = vmatpush.bf16.msra.mxu0 %v1030
        %1360 = vmatmul.bf16.gmra.mxu0 %v746
        %v1361 = vpop.f32.mrf.mxu0
        %v1362 = vadd.f32 %v830, %v1361
        %v1363 = vpop.f32.mrf.mxu0
        %v1364 = vadd.f32 %v830, %v1363
        %1365 = vmatmul.bf16.gmra.mxu0 %v748
        %v1366 = vpop.f32.mrf.mxu0
        %v1367 = vadd.f32 %v830, %v1366
        %v1368 = vpop.f32.mrf.mxu0
        %v1369 = vadd.f32 %v830, %v1368
        %1370 = vmatmul.bf16.gmra.mxu0 %v750
        %v1371 = vpop.f32.mrf.mxu0
        %v1372 = vadd.f32 %v830, %v1371
        %v1373 = vpop.f32.mrf.mxu0
        %v1374 = vadd.f32 %v830, %v1373
        %1375 = vmatmul.bf16.gmra.mxu0 %v752
        %v1376 = vpop.f32.mrf.mxu0
        %v1377 = vadd.f32 %v830, %v1376
        %v1378 = vpop.f32.mrf.mxu0
        %v1379 = vadd.f32 %v830, %v1378
        %1380 = vmatmul.bf16.gmra.mxu0 %v754
        %v1381 = vpop.f32.mrf.mxu0
        %v1382 = vadd.f32 %v830, %v1381
        %v1383 = vpop.f32.mrf.mxu0
        %v1384 = vadd.f32 %v830, %v1383
        %1385 = vmatmul.bf16.gmra.mxu0 %v756
        %v1386 = vpop.f32.mrf.mxu0
        %v1387 = vadd.f32 %v830, %v1386
        %v1388 = vpop.f32.mrf.mxu0
        %v1389 = vadd.f32 %v830, %v1388
        %1390 = vmatmul.bf16.gmra.mxu0 %v758
        %v1391 = vpop.f32.mrf.mxu0
        %v1392 = vadd.f32 %v830, %v1391
        %v1393 = vpop.f32.mrf.mxu0
        %v1394 = vadd.f32 %v830, %v1393
        %1395 = vmatmul.bf16.gmra.mxu0 %v760
        %v1396 = vpop.f32.mrf.mxu0
        %v1397 = vadd.f32 %v830, %v1396
        %v1398 = vpop.f32.mrf.mxu0
        %v1399 = vadd.f32 %v830, %v1398
        %1400 = vdwg.mxu0
        %1401 = vmatpush.bf16.msra.mxu0 %v1090
        %1402 = vmatpush.bf16.msra.mxu0 %v1086
        %1403 = vmatpush.bf16.msra.mxu0 %v1082
        %1404 = vmatpush.bf16.msra.mxu0 %v1078
        %1405 = vmatpush.bf16.msra.mxu0 %v1074
        %1406 = vmatpush.bf16.msra.mxu0 %v1070
        %1407 = vmatpush.bf16.msra.mxu0 %v1066
        %1408 = vmatpush.bf16.msra.mxu0 %v1062
        %1409 = vmatmul.bf16.gmra.mxu0 %v747
        %v1410 = vpop.f32.mrf.mxu0
        %v1411 = vadd.f32 %v1362, %v1410
        %v1412 = vpop.f32.mrf.mxu0
        %v1413 = vadd.f32 %v1364, %v1412
        %1414 = vmatmul.bf16.gmra.mxu0 %v749
        %v1415 = vpop.f32.mrf.mxu0
        %v1416 = vadd.f32 %v1367, %v1415
        %v1417 = vpop.f32.mrf.mxu0
        %v1418 = vadd.f32 %v1369, %v1417
        %1419 = vmatmul.bf16.gmra.mxu0 %v751
        %v1420 = vpop.f32.mrf.mxu0
        %v1421 = vadd.f32 %v1372, %v1420
        %v1422 = vpop.f32.mrf.mxu0
        %v1423 = vadd.f32 %v1374, %v1422
        %1424 = vmatmul.bf16.gmra.mxu0 %v753
        %v1425 = vpop.f32.mrf.mxu0
        %v1426 = vadd.f32 %v1377, %v1425
        %v1427 = vpop.f32.mrf.mxu0
        %v1428 = vadd.f32 %v1379, %v1427
        %1429 = vmatmul.bf16.gmra.mxu0 %v755
        %v1430 = vpop.f32.mrf.mxu0
        %v1431 = vadd.f32 %v1382, %v1430
        %v1432 = vpop.f32.mrf.mxu0
        %v1433 = vadd.f32 %v1384, %v1432
        %1434 = vmatmul.bf16.gmra.mxu0 %v757
        %v1435 = vpop.f32.mrf.mxu0
        %v1436 = vadd.f32 %v1387, %v1435
        %v1437 = vpop.f32.mrf.mxu0
        %v1438 = vadd.f32 %v1389, %v1437
        %1439 = vmatmul.bf16.gmra.mxu0 %v759
        %v1440 = vpop.f32.mrf.mxu0
        %v1441 = vadd.f32 %v1392, %v1440
        %v1442 = vpop.f32.mrf.mxu0
        %v1443 = vadd.f32 %v1394, %v1442
        %1444 = vmatmul.bf16.gmra.mxu0 %v761
        %v1445 = vpop.f32.mrf.mxu0
        %v1446 = vadd.f32 %v1397, %v1445
        %v1447 = vpop.f32.mrf.mxu0
        %v1448 = vadd.f32 %v1399, %v1447
        %1449 = vdwg.mxu0
        %1450 = vmatpush.bf16.msra.mxu0 %v1059
        %1451 = vmatpush.bf16.msra.mxu0 %v1055
        %1452 = vmatpush.bf16.msra.mxu0 %v1051
        %1453 = vmatpush.bf16.msra.mxu0 %v1047
        %1454 = vmatpush.bf16.msra.mxu0 %v1043
        %1455 = vmatpush.bf16.msra.mxu0 %v1039
        %1456 = vmatpush.bf16.msra.mxu0 %v1035
        %1457 = vmatpush.bf16.msra.mxu0 %v1031
        %1458 = vmatmul.bf16.gmra.mxu0 %v746
        %v1459 = vpop.f32.mrf.mxu0
        %v1460 = vadd.f32 %v831, %v1459
        %v1461 = vpop.f32.mrf.mxu0
        %v1462 = vadd.f32 %v831, %v1461
        %1463 = vmatmul.bf16.gmra.mxu0 %v748
        %v1464 = vpop.f32.mrf.mxu0
        %v1465 = vadd.f32 %v831, %v1464
        %v1466 = vpop.f32.mrf.mxu0
        %v1467 = vadd.f32 %v831, %v1466
        %1468 = vmatmul.bf16.gmra.mxu0 %v750
        %v1469 = vpop.f32.mrf.mxu0
        %v1470 = vadd.f32 %v831, %v1469
        %v1471 = vpop.f32.mrf.mxu0
        %v1472 = vadd.f32 %v831, %v1471
        %1473 = vmatmul.bf16.gmra.mxu0 %v752
        %v1474 = vpop.f32.mrf.mxu0
        %v1475 = vadd.f32 %v831, %v1474
        %v1476 = vpop.f32.mrf.mxu0
        %v1477 = vadd.f32 %v831, %v1476
        %1478 = vmatmul.bf16.gmra.mxu0 %v754
        %v1479 = vpop.f32.mrf.mxu0
        %v1480 = vadd.f32 %v831, %v1479
        %v1481 = vpop.f32.mrf.mxu0
        %v1482 = vadd.f32 %v831, %v1481
        %1483 = vmatmul.bf16.gmra.mxu0 %v756
        %v1484 = vpop.f32.mrf.mxu0
        %v1485 = vadd.f32 %v831, %v1484
        %v1486 = vpop.f32.mrf.mxu0
        %v1487 = vadd.f32 %v831, %v1486
        %1488 = vmatmul.bf16.gmra.mxu0 %v758
        %v1489 = vpop.f32.mrf.mxu0
        %v1490 = vadd.f32 %v831, %v1489
        %v1491 = vpop.f32.mrf.mxu0
        %v1492 = vadd.f32 %v831, %v1491
        %1493 = vmatmul.bf16.gmra.mxu0 %v760
        %v1494 = vpop.f32.mrf.mxu0
        %v1495 = vadd.f32 %v831, %v1494
        %v1496 = vpop.f32.mrf.mxu0
        %v1497 = vadd.f32 %v831, %v1496
        %1498 = vdwg.mxu0
        %1499 = vmatpush.bf16.msra.mxu0 %v1091
        %1500 = vmatpush.bf16.msra.mxu0 %v1087
        %1501 = vmatpush.bf16.msra.mxu0 %v1083
        %1502 = vmatpush.bf16.msra.mxu0 %v1079
        %1503 = vmatpush.bf16.msra.mxu0 %v1075
        %1504 = vmatpush.bf16.msra.mxu0 %v1071
        %1505 = vmatpush.bf16.msra.mxu0 %v1067
        %1506 = vmatpush.bf16.msra.mxu0 %v1063
        %1507 = vmatmul.bf16.gmra.mxu0 %v747
        %v1508 = vpop.f32.mrf.mxu0
        %v1509 = vadd.f32 %v1460, %v1508
        %v1510 = vpop.f32.mrf.mxu0
        %v1511 = vadd.f32 %v1462, %v1510
        %1512 = vmatmul.bf16.gmra.mxu0 %v749
        %v1513 = vpop.f32.mrf.mxu0
        %v1514 = vadd.f32 %v1465, %v1513
        %v1515 = vpop.f32.mrf.mxu0
        %v1516 = vadd.f32 %v1467, %v1515
        %1517 = vmatmul.bf16.gmra.mxu0 %v751
        %v1518 = vpop.f32.mrf.mxu0
        %v1519 = vadd.f32 %v1470, %v1518
        %v1520 = vpop.f32.mrf.mxu0
        %v1521 = vadd.f32 %v1472, %v1520
        %1522 = vmatmul.bf16.gmra.mxu0 %v753
        %v1523 = vpop.f32.mrf.mxu0
        %v1524 = vadd.f32 %v1475, %v1523
        %v1525 = vpop.f32.mrf.mxu0
        %v1526 = vadd.f32 %v1477, %v1525
        %1527 = vmatmul.bf16.gmra.mxu0 %v755
        %v1528 = vpop.f32.mrf.mxu0
        %v1529 = vadd.f32 %v1480, %v1528
        %v1530 = vpop.f32.mrf.mxu0
        %v1531 = vadd.f32 %v1482, %v1530
        %1532 = vmatmul.bf16.gmra.mxu0 %v757
        %v1533 = vpop.f32.mrf.mxu0
        %v1534 = vadd.f32 %v1485, %v1533
        %v1535 = vpop.f32.mrf.mxu0
        %v1536 = vadd.f32 %v1487, %v1535
        %1537 = vmatmul.bf16.gmra.mxu0 %v759
        %v1538 = vpop.f32.mrf.mxu0
        %v1539 = vadd.f32 %v1490, %v1538
        %v1540 = vpop.f32.mrf.mxu0
        %v1541 = vadd.f32 %v1492, %v1540
        %1542 = vmatmul.bf16.gmra.mxu0 %v761
        %v1543 = vpop.f32.mrf.mxu0
        %v1544 = vadd.f32 %v1495, %v1543
        %v1545 = vpop.f32.mrf.mxu0
        %v1546 = vadd.f32 %v1497, %v1545
        %1547 = vdwg.mxu0
        %v1548 = vmax.f32 %v1215, 0.0
        %v1549 = vmax.f32 %v1313, 0.0
        %v1550 = vmax.f32 %v1411, 0.0
        %v1551 = vmax.f32 %v1509, 0.0
        %v1552 = vmax.f32 %v1217, 0.0
        %v1553 = vmax.f32 %v1315, 0.0
        %v1554 = vmax.f32 %v1413, 0.0
        %v1555 = vmax.f32 %v1511, 0.0
        %v1556 = vmax.f32 %v1220, 0.0
        %v1557 = vmax.f32 %v1318, 0.0
        %v1558 = vmax.f32 %v1416, 0.0
        %v1559 = vmax.f32 %v1514, 0.0
        %v1560 = vmax.f32 %v1222, 0.0
        %v1561 = vmax.f32 %v1320, 0.0
        %v1562 = vmax.f32 %v1418, 0.0
        %v1563 = vmax.f32 %v1516, 0.0
        %v1564 = vmax.f32 %v1225, 0.0
        %v1565 = vmax.f32 %v1323, 0.0
        %v1566 = vmax.f32 %v1421, 0.0
        %v1567 = vmax.f32 %v1519, 0.0
        %v1568 = vmax.f32 %v1227, 0.0
        %v1569 = vmax.f32 %v1325, 0.0
        %v1570 = vmax.f32 %v1423, 0.0
        %v1571 = vmax.f32 %v1521, 0.0
        %v1572 = vmax.f32 %v1230, 0.0
        %v1573 = vmax.f32 %v1328, 0.0
        %v1574 = vmax.f32 %v1426, 0.0
        %v1575 = vmax.f32 %v1524, 0.0
        %v1576 = vmax.f32 %v1232, 0.0
        %v1577 = vmax.f32 %v1330, 0.0
        %v1578 = vmax.f32 %v1428, 0.0
        %v1579 = vmax.f32 %v1526, 0.0
        %v1580 = vmax.f32 %v1235, 0.0
        %v1581 = vmax.f32 %v1333, 0.0
        %v1582 = vmax.f32 %v1431, 0.0
        %v1583 = vmax.f32 %v1529, 0.0
        %v1584 = vmax.f32 %v1237, 0.0
        %v1585 = vmax.f32 %v1335, 0.0
        %v1586 = vmax.f32 %v1433, 0.0
        %v1587 = vmax.f32 %v1531, 0.0
        %v1588 = vmax.f32 %v1240, 0.0
        %v1589 = vmax.f32 %v1338, 0.0
        %v1590 = vmax.f32 %v1436, 0.0
        %v1591 = vmax.f32 %v1534, 0.0
        %v1592 = vmax.f32 %v1242, 0.0
        %v1593 = vmax.f32 %v1340, 0.0
        %v1594 = vmax.f32 %v1438, 0.0
        %v1595 = vmax.f32 %v1536, 0.0
        %v1596 = vmax.f32 %v1245, 0.0
        %v1597 = vmax.f32 %v1343, 0.0
        %v1598 = vmax.f32 %v1441, 0.0
        %v1599 = vmax.f32 %v1539, 0.0
        %v1600 = vmax.f32 %v1247, 0.0
        %v1601 = vmax.f32 %v1345, 0.0
        %v1602 = vmax.f32 %v1443, 0.0
        %v1603 = vmax.f32 %v1541, 0.0
        %v1604 = vmax.f32 %v1250, 0.0
        %v1605 = vmax.f32 %v1348, 0.0
        %v1606 = vmax.f32 %v1446, 0.0
        %v1607 = vmax.f32 %v1544, 0.0
        %v1608 = vmax.f32 %v1252, 0.0
        %v1609 = vmax.f32 %v1350, 0.0
        %v1610 = vmax.f32 %v1448, 0.0
        %v1611 = vmax.f32 %v1546, 0.0
        %v1612 = vpack.c.bf16 %v1552, %v1548
        %v1613 = vpack.c.bf16 %v1553, %v1549
        %v1614 = vpack.c.bf16 %v1554, %v1550
        %v1615 = vpack.c.bf16 %v1555, %v1551
        %v1616 = vpack.c.bf16 %v1560, %v1556
        %v1617 = vpack.c.bf16 %v1561, %v1557
        %v1618 = vpack.c.bf16 %v1562, %v1558
        %v1619 = vpack.c.bf16 %v1563, %v1559
        %v1620 = vpack.c.bf16 %v1568, %v1564
        %v1621 = vpack.c.bf16 %v1569, %v1565
        %v1622 = vpack.c.bf16 %v1570, %v1566
        %v1623 = vpack.c.bf16 %v1571, %v1567
        %v1624 = vpack.c.bf16 %v1576, %v1572
        %v1625 = vpack.c.bf16 %v1577, %v1573
        %v1626 = vpack.c.bf16 %v1578, %v1574
        %v1627 = vpack.c.bf16 %v1579, %v1575
        %v1628 = vpack.c.bf16 %v1584, %v1580
        %v1629 = vpack.c.bf16 %v1585, %v1581
        %v1630 = vpack.c.bf16 %v1586, %v1582
        %v1631 = vpack.c.bf16 %v1587, %v1583
        %v1632 = vpack.c.bf16 %v1592, %v1588
        %v1633 = vpack.c.bf16 %v1593, %v1589
        %v1634 = vpack.c.bf16 %v1594, %v1590
        %v1635 = vpack.c.bf16 %v1595, %v1591
        %v1636 = vpack.c.bf16 %v1600, %v1596
        %v1637 = vpack.c.bf16 %v1601, %v1597
        %v1638 = vpack.c.bf16 %v1602, %v1598
        %v1639 = vpack.c.bf16 %v1603, %v1599
        %v1640 = vpack.c.bf16 %v1608, %v1604
        %v1641 = vpack.c.bf16 %v1609, %v1605
        %v1642 = vpack.c.bf16 %v1610, %v1606
        %v1643 = vpack.c.bf16 %v1611, %v1607
        %v1644 = vld [vmem:[#allocation11] sm:$0xf]
        %v1645 = vld [vmem:[#allocation11 + $0x4] sm:$0xf]
        %v1646 = vld [vmem:[#allocation11 + $0x8] sm:$0xf]
        %v1647 = vld [vmem:[#allocation11 + $0xc] sm:$0xf]
        %v1648 = vld [vmem:[#allocation11 + $0x10] sm:$0xf]
        %v1649 = vld [vmem:[#allocation11 + $0x14] sm:$0xf]
        %v1650 = vld [vmem:[#allocation11 + $0x18] sm:$0xf]
        %v1651 = vld [vmem:[#allocation11 + $0x1c] sm:$0xf]
        %v1652 = vld [vmem:[#allocation11 + $0x20] sm:$0xf]
        %v1653 = vld [vmem:[#allocation11 + $0x24] sm:$0xf]
        %v1654 = vld [vmem:[#allocation11 + $0x28] sm:$0xf]
        %v1655 = vld [vmem:[#allocation11 + $0x2c] sm:$0xf]
        %v1656 = vld [vmem:[#allocation11 + $0x30] sm:$0xf]
        %v1657 = vld [vmem:[#allocation11 + $0x34] sm:$0xf]
        %v1658 = vld [vmem:[#allocation11 + $0x38] sm:$0xf]
        %v1659 = vld [vmem:[#allocation11 + $0x3c] sm:$0xf]
        %v1660 = vld [vmem:[#allocation11 + $0x40] sm:$0xf]
        %v1661 = vld [vmem:[#allocation11 + $0x44] sm:$0xf]
        %v1662 = vld [vmem:[#allocation11 + $0x48] sm:$0xf]
        %v1663 = vld [vmem:[#allocation11 + $0x4c] sm:$0xf]
        %v1664 = vld [vmem:[#allocation11 + $0x50] sm:$0xf]
        %v1665 = vld [vmem:[#allocation11 + $0x54] sm:$0xf]
        %v1666 = vld [vmem:[#allocation11 + $0x58] sm:$0xf]
        %v1667 = vld [vmem:[#allocation11 + $0x5c] sm:$0xf]
        %v1668 = vld [vmem:[#allocation11 + $0x60] sm:$0xf]
        %v1669 = vld [vmem:[#allocation11 + $0x64] sm:$0xf]
        %v1670 = vld [vmem:[#allocation11 + $0x68] sm:$0xf]
        %v1671 = vld [vmem:[#allocation11 + $0x6c] sm:$0xf]
        %v1672 = vld [vmem:[#allocation11 + $0x70] sm:$0xf]
        %v1673 = vld [vmem:[#allocation11 + $0x74] sm:$0xf]
        %v1674 = vld [vmem:[#allocation11 + $0x78] sm:$0xf]
        %v1675 = vld [vmem:[#allocation11 + $0x7c] sm:$0xf]
        %v1676 = vld [vmem:[#allocation11 + $0x80] sm:$0xf]
        %v1677 = vld [vmem:[#allocation11 + $0x84] sm:$0xf]
        %v1678 = vld [vmem:[#allocation11 + $0x88] sm:$0xf]
        %v1679 = vld [vmem:[#allocation11 + $0x8c] sm:$0xf]
        %v1680 = vld [vmem:[#allocation11 + $0x90] sm:$0xf]
        %v1681 = vld [vmem:[#allocation11 + $0x94] sm:$0xf]
        %v1682 = vld [vmem:[#allocation11 + $0x98] sm:$0xf]
        %v1683 = vld [vmem:[#allocation11 + $0x9c] sm:$0xf]
        %v1684 = vld [vmem:[#allocation11 + $0xa0] sm:$0xf]
        %v1685 = vld [vmem:[#allocation11 + $0xa4] sm:$0xf]
        %v1686 = vld [vmem:[#allocation11 + $0xa8] sm:$0xf]
        %v1687 = vld [vmem:[#allocation11 + $0xac] sm:$0xf]
        %v1688 = vld [vmem:[#allocation11 + $0xb0] sm:$0xf]
        %v1689 = vld [vmem:[#allocation11 + $0xb4] sm:$0xf]
        %v1690 = vld [vmem:[#allocation11 + $0xb8] sm:$0xf]
        %v1691 = vld [vmem:[#allocation11 + $0xbc] sm:$0xf]
        %v1692 = vld [vmem:[#allocation11 + $0xc0] sm:$0xf]
        %v1693 = vld [vmem:[#allocation11 + $0xc4] sm:$0xf]
        %v1694 = vld [vmem:[#allocation11 + $0xc8] sm:$0xf]
        %v1695 = vld [vmem:[#allocation11 + $0xcc] sm:$0xf]
        %v1696 = vld [vmem:[#allocation11 + $0xd0] sm:$0xf]
        %v1697 = vld [vmem:[#allocation11 + $0xd4] sm:$0xf]
        %v1698 = vld [vmem:[#allocation11 + $0xd8] sm:$0xf]
        %v1699 = vld [vmem:[#allocation11 + $0xdc] sm:$0xf]
        %v1700 = vld [vmem:[#allocation11 + $0xe0] sm:$0xf]
        %v1701 = vld [vmem:[#allocation11 + $0xe4] sm:$0xf]
        %v1702 = vld [vmem:[#allocation11 + $0xe8] sm:$0xf]
        %v1703 = vld [vmem:[#allocation11 + $0xec] sm:$0xf]
        %v1704 = vld [vmem:[#allocation11 + $0xf0] sm:$0xf]
        %v1705 = vld [vmem:[#allocation11 + $0xf4] sm:$0xf]
        %v1706 = vld [vmem:[#allocation11 + $0xf8] sm:$0xf]
        %v1707 = vld [vmem:[#allocation11 + $0xfc] sm:$0xf]
        %v1708 = vld [vmem:[%s6] sm:$0x1]
        %v1710 = vperm.slane %v1708, 0
        %v1776 = vunpack.c.l.b16 %v1644
        %v1777 = vunpack.c.l.b16 %v1645
        %v1778 = vunpack.c.l.b16 %v1646
        %v1779 = vunpack.c.l.b16 %v1647
        %v1780 = vunpack.c.l.b16 %v1648
        %v1781 = vunpack.c.l.b16 %v1649
        %v1782 = vunpack.c.l.b16 %v1650
        %v1783 = vunpack.c.l.b16 %v1651
        %v1784 = vunpack.c.l.b16 %v1652
        %v1785 = vunpack.c.l.b16 %v1653
        %v1786 = vunpack.c.l.b16 %v1654
        %v1787 = vunpack.c.l.b16 %v1655
        %v1788 = vunpack.c.l.b16 %v1656
        %v1789 = vunpack.c.l.b16 %v1657
        %v1790 = vunpack.c.l.b16 %v1658
        %v1791 = vunpack.c.l.b16 %v1659
        %v1792 = vunpack.c.l.b16 %v1660
        %v1793 = vunpack.c.l.b16 %v1661
        %v1794 = vunpack.c.l.b16 %v1662
        %v1795 = vunpack.c.l.b16 %v1663
        %v1796 = vunpack.c.l.b16 %v1664
        %v1797 = vunpack.c.l.b16 %v1665
        %v1798 = vunpack.c.l.b16 %v1666
        %v1799 = vunpack.c.l.b16 %v1667
        %v1800 = vunpack.c.l.b16 %v1668
        %v1801 = vunpack.c.l.b16 %v1669
        %v1802 = vunpack.c.l.b16 %v1670
        %v1803 = vunpack.c.l.b16 %v1671
        %v1804 = vunpack.c.l.b16 %v1672
        %v1805 = vunpack.c.l.b16 %v1673
        %v1806 = vunpack.c.l.b16 %v1674
        %v1807 = vunpack.c.l.b16 %v1675
        %v1808 = vunpack.c.l.b16 %v1676
        %v1809 = vunpack.c.l.b16 %v1677
        %v1810 = vunpack.c.l.b16 %v1678
        %v1811 = vunpack.c.l.b16 %v1679
        %v1812 = vunpack.c.l.b16 %v1680
        %v1813 = vunpack.c.l.b16 %v1681
        %v1814 = vunpack.c.l.b16 %v1682
        %v1815 = vunpack.c.l.b16 %v1683
        %v1816 = vunpack.c.l.b16 %v1684
        %v1817 = vunpack.c.l.b16 %v1685
        %v1818 = vunpack.c.l.b16 %v1686
        %v1819 = vunpack.c.l.b16 %v1687
        %v1820 = vunpack.c.l.b16 %v1688
        %v1821 = vunpack.c.l.b16 %v1689
        %v1822 = vunpack.c.l.b16 %v1690
        %v1823 = vunpack.c.l.b16 %v1691
        %v1824 = vunpack.c.l.b16 %v1692
        %v1825 = vunpack.c.l.b16 %v1693
        %v1826 = vunpack.c.l.b16 %v1694
        %v1827 = vunpack.c.l.b16 %v1695
        %v1828 = vunpack.c.l.b16 %v1696
        %v1829 = vunpack.c.l.b16 %v1697
        %v1830 = vunpack.c.l.b16 %v1698
        %v1831 = vunpack.c.l.b16 %v1699
        %v1832 = vunpack.c.l.b16 %v1700
        %v1833 = vunpack.c.l.b16 %v1701
        %v1834 = vunpack.c.l.b16 %v1702
        %v1835 = vunpack.c.l.b16 %v1703
        %v1836 = vunpack.c.l.b16 %v1704
        %v1837 = vunpack.c.l.b16 %v1705
        %v1838 = vunpack.c.l.b16 %v1706
        %v1839 = vunpack.c.l.b16 %v1707
        %v1840 = vpack.c.b16 %v1777, %v1776
        %v1841 = vpack.c.b16 %v1779, %v1778
        %v1842 = vpack.c.b16 %v1781, %v1780
        %v1843 = vpack.c.b16 %v1783, %v1782
        %v1844 = vpack.c.b16 %v1785, %v1784
        %v1845 = vpack.c.b16 %v1787, %v1786
        %v1846 = vpack.c.b16 %v1789, %v1788
        %v1847 = vpack.c.b16 %v1791, %v1790
        %v1848 = vpack.c.b16 %v1793, %v1792
        %v1849 = vpack.c.b16 %v1795, %v1794
        %v1850 = vpack.c.b16 %v1797, %v1796
        %v1851 = vpack.c.b16 %v1799, %v1798
        %v1852 = vpack.c.b16 %v1801, %v1800
        %v1853 = vpack.c.b16 %v1803, %v1802
        %v1854 = vpack.c.b16 %v1805, %v1804
        %v1855 = vpack.c.b16 %v1807, %v1806
        %v1856 = vpack.c.b16 %v1809, %v1808
        %v1857 = vpack.c.b16 %v1811, %v1810
        %v1858 = vpack.c.b16 %v1813, %v1812
        %v1859 = vpack.c.b16 %v1815, %v1814
        %v1860 = vpack.c.b16 %v1817, %v1816
        %v1861 = vpack.c.b16 %v1819, %v1818
        %v1862 = vpack.c.b16 %v1821, %v1820
        %v1863 = vpack.c.b16 %v1823, %v1822
        %v1864 = vpack.c.b16 %v1825, %v1824
        %v1865 = vpack.c.b16 %v1827, %v1826
        %v1866 = vpack.c.b16 %v1829, %v1828
        %v1867 = vpack.c.b16 %v1831, %v1830
        %v1868 = vpack.c.b16 %v1833, %v1832
        %v1869 = vpack.c.b16 %v1835, %v1834
        %v1870 = vpack.c.b16 %v1837, %v1836
        %v1871 = vpack.c.b16 %v1839, %v1838
        %1904 = vmatpush.bf16.msra.mxu0 %v1847
        %1905 = vmatpush.bf16.msra.mxu0 %v1846
        %1906 = vmatpush.bf16.msra.mxu0 %v1845
        %1907 = vmatpush.bf16.msra.mxu0 %v1844
        %1908 = vmatpush.bf16.msra.mxu0 %v1843
        %1909 = vmatpush.bf16.msra.mxu0 %v1842
        %1910 = vmatpush.bf16.msra.mxu0 %v1841
        %1911 = vmatpush.bf16.msra.mxu0 %v1840
        %1912 = vmatmul.bf16.gmra.mxu0 %v1612
        %v1913 = vpop.f32.mrf.mxu0
        %v1914 = vadd.f32 %v1710, %v1913
        %v1915 = vpop.f32.mrf.mxu0
        %v1916 = vadd.f32 %v1710, %v1915
        %1917 = vmatmul.bf16.gmra.mxu0 %v1616
        %v1918 = vpop.f32.mrf.mxu0
        %v1919 = vadd.f32 %v1710, %v1918
        %v1920 = vpop.f32.mrf.mxu0
        %v1921 = vadd.f32 %v1710, %v1920
        %1922 = vmatmul.bf16.gmra.mxu0 %v1620
        %v1923 = vpop.f32.mrf.mxu0
        %v1924 = vadd.f32 %v1710, %v1923
        %v1925 = vpop.f32.mrf.mxu0
        %v1926 = vadd.f32 %v1710, %v1925
        %1927 = vmatmul.bf16.gmra.mxu0 %v1624
        %v1928 = vpop.f32.mrf.mxu0
        %v1929 = vadd.f32 %v1710, %v1928
        %v1930 = vpop.f32.mrf.mxu0
        %v1931 = vadd.f32 %v1710, %v1930
        %1932 = vmatmul.bf16.gmra.mxu0 %v1628
        %v1933 = vpop.f32.mrf.mxu0
        %v1934 = vadd.f32 %v1710, %v1933
        %v1935 = vpop.f32.mrf.mxu0
        %v1936 = vadd.f32 %v1710, %v1935
        %1937 = vmatmul.bf16.gmra.mxu0 %v1632
        %v1938 = vpop.f32.mrf.mxu0
        %v1939 = vadd.f32 %v1710, %v1938
        %v1940 = vpop.f32.mrf.mxu0
        %v1941 = vadd.f32 %v1710, %v1940
        %1942 = vmatmul.bf16.gmra.mxu0 %v1636
        %v1943 = vpop.f32.mrf.mxu0
        %v1944 = vadd.f32 %v1710, %v1943
        %v1945 = vpop.f32.mrf.mxu0
        %v1946 = vadd.f32 %v1710, %v1945
        %1947 = vmatmul.bf16.gmra.mxu0 %v1640
        %v1948 = vpop.f32.mrf.mxu0
        %v1949 = vadd.f32 %v1710, %v1948
        %v1950 = vpop.f32.mrf.mxu0
        %v1951 = vadd.f32 %v1710, %v1950
        %1952 = vdwg.mxu0
        %1953 = vmatpush.bf16.msra.mxu0 %v1855
        %1954 = vmatpush.bf16.msra.mxu0 %v1854
        %1955 = vmatpush.bf16.msra.mxu0 %v1853
        %1956 = vmatpush.bf16.msra.mxu0 %v1852
        %1957 = vmatpush.bf16.msra.mxu0 %v1851
        %1958 = vmatpush.bf16.msra.mxu0 %v1850
        %1959 = vmatpush.bf16.msra.mxu0 %v1849
        %1960 = vmatpush.bf16.msra.mxu0 %v1848
        %1961 = vmatmul.bf16.gmra.mxu0 %v1613
        %v1962 = vpop.f32.mrf.mxu0
        %v1963 = vadd.f32 %v1914, %v1962
        %v1964 = vpop.f32.mrf.mxu0
        %v1965 = vadd.f32 %v1916, %v1964
        %1966 = vmatmul.bf16.gmra.mxu0 %v1617
        %v1967 = vpop.f32.mrf.mxu0
        %v1968 = vadd.f32 %v1919, %v1967
        %v1969 = vpop.f32.mrf.mxu0
        %v1970 = vadd.f32 %v1921, %v1969
        %1971 = vmatmul.bf16.gmra.mxu0 %v1621
        %v1972 = vpop.f32.mrf.mxu0
        %v1973 = vadd.f32 %v1924, %v1972
        %v1974 = vpop.f32.mrf.mxu0
        %v1975 = vadd.f32 %v1926, %v1974
        %1976 = vmatmul.bf16.gmra.mxu0 %v1625
        %v1977 = vpop.f32.mrf.mxu0
        %v1978 = vadd.f32 %v1929, %v1977
        %v1979 = vpop.f32.mrf.mxu0
        %v1980 = vadd.f32 %v1931, %v1979
        %1981 = vmatmul.bf16.gmra.mxu0 %v1629
        %v1982 = vpop.f32.mrf.mxu0
        %v1983 = vadd.f32 %v1934, %v1982
        %v1984 = vpop.f32.mrf.mxu0
        %v1985 = vadd.f32 %v1936, %v1984
        %1986 = vmatmul.bf16.gmra.mxu0 %v1633
        %v1987 = vpop.f32.mrf.mxu0
        %v1988 = vadd.f32 %v1939, %v1987
        %v1989 = vpop.f32.mrf.mxu0
        %v1990 = vadd.f32 %v1941, %v1989
        %1991 = vmatmul.bf16.gmra.mxu0 %v1637
        %v1992 = vpop.f32.mrf.mxu0
        %v1993 = vadd.f32 %v1944, %v1992
        %v1994 = vpop.f32.mrf.mxu0
        %v1995 = vadd.f32 %v1946, %v1994
        %1996 = vmatmul.bf16.gmra.mxu0 %v1641
        %v1997 = vpop.f32.mrf.mxu0
        %v1998 = vadd.f32 %v1949, %v1997
        %v1999 = vpop.f32.mrf.mxu0
        %v2000 = vadd.f32 %v1951, %v1999
        %2001 = vdwg.mxu0
        %2002 = vmatpush.bf16.msra.mxu0 %v1863
        %2003 = vmatpush.bf16.msra.mxu0 %v1862
        %2004 = vmatpush.bf16.msra.mxu0 %v1861
        %2005 = vmatpush.bf16.msra.mxu0 %v1860
        %2006 = vmatpush.bf16.msra.mxu0 %v1859
        %2007 = vmatpush.bf16.msra.mxu0 %v1858
        %2008 = vmatpush.bf16.msra.mxu0 %v1857
        %2009 = vmatpush.bf16.msra.mxu0 %v1856
        %2010 = vmatmul.bf16.gmra.mxu0 %v1614
        %v2011 = vpop.f32.mrf.mxu0
        %v2012 = vadd.f32 %v1963, %v2011
        %v2013 = vpop.f32.mrf.mxu0
        %v2014 = vadd.f32 %v1965, %v2013
        %2015 = vmatmul.bf16.gmra.mxu0 %v1618
        %v2016 = vpop.f32.mrf.mxu0
        %v2017 = vadd.f32 %v1968, %v2016
        %v2018 = vpop.f32.mrf.mxu0
        %v2019 = vadd.f32 %v1970, %v2018
        %2020 = vmatmul.bf16.gmra.mxu0 %v1622
        %v2021 = vpop.f32.mrf.mxu0
        %v2022 = vadd.f32 %v1973, %v2021
        %v2023 = vpop.f32.mrf.mxu0
        %v2024 = vadd.f32 %v1975, %v2023
        %2025 = vmatmul.bf16.gmra.mxu0 %v1626
        %v2026 = vpop.f32.mrf.mxu0
        %v2027 = vadd.f32 %v1978, %v2026
        %v2028 = vpop.f32.mrf.mxu0
        %v2029 = vadd.f32 %v1980, %v2028
        %2030 = vmatmul.bf16.gmra.mxu0 %v1630
        %v2031 = vpop.f32.mrf.mxu0
        %v2032 = vadd.f32 %v1983, %v2031
        %v2033 = vpop.f32.mrf.mxu0
        %v2034 = vadd.f32 %v1985, %v2033
        %2035 = vmatmul.bf16.gmra.mxu0 %v1634
        %v2036 = vpop.f32.mrf.mxu0
        %v2037 = vadd.f32 %v1988, %v2036
        %v2038 = vpop.f32.mrf.mxu0
        %v2039 = vadd.f32 %v1990, %v2038
        %2040 = vmatmul.bf16.gmra.mxu0 %v1638
        %v2041 = vpop.f32.mrf.mxu0
        %v2042 = vadd.f32 %v1993, %v2041
        %v2043 = vpop.f32.mrf.mxu0
        %v2044 = vadd.f32 %v1995, %v2043
        %2045 = vmatmul.bf16.gmra.mxu0 %v1642
        %v2046 = vpop.f32.mrf.mxu0
        %v2047 = vadd.f32 %v1998, %v2046
        %v2048 = vpop.f32.mrf.mxu0
        %v2049 = vadd.f32 %v2000, %v2048
        %2050 = vdwg.mxu0
        %2051 = vmatpush.bf16.msra.mxu0 %v1871
        %2052 = vmatpush.bf16.msra.mxu0 %v1870
        %2053 = vmatpush.bf16.msra.mxu0 %v1869
        %2054 = vmatpush.bf16.msra.mxu0 %v1868
        %2055 = vmatpush.bf16.msra.mxu0 %v1867
        %2056 = vmatpush.bf16.msra.mxu0 %v1866
        %2057 = vmatpush.bf16.msra.mxu0 %v1865
        %2058 = vmatpush.bf16.msra.mxu0 %v1864
        %2059 = vmatmul.bf16.gmra.mxu0 %v1615
        %v2060 = vpop.f32.mrf.mxu0
        %v2061 = vadd.f32 %v2012, %v2060
        %v2062 = vpop.f32.mrf.mxu0
        %v2063 = vadd.f32 %v2014, %v2062
        %2064 = vmatmul.bf16.gmra.mxu0 %v1619
        %v2065 = vpop.f32.mrf.mxu0
        %v2066 = vadd.f32 %v2017, %v2065
        %v2067 = vpop.f32.mrf.mxu0
        %v2068 = vadd.f32 %v2019, %v2067
        %2069 = vmatmul.bf16.gmra.mxu0 %v1623
        %v2070 = vpop.f32.mrf.mxu0
        %v2071 = vadd.f32 %v2022, %v2070
        %v2072 = vpop.f32.mrf.mxu0
        %v2073 = vadd.f32 %v2024, %v2072
        %2074 = vmatmul.bf16.gmra.mxu0 %v1627
        %v2075 = vpop.f32.mrf.mxu0
        %v2076 = vadd.f32 %v2027, %v2075
        %v2077 = vpop.f32.mrf.mxu0
        %v2078 = vadd.f32 %v2029, %v2077
        %2079 = vmatmul.bf16.gmra.mxu0 %v1631
        %v2080 = vpop.f32.mrf.mxu0
        %v2081 = vadd.f32 %v2032, %v2080
        %v2082 = vpop.f32.mrf.mxu0
        %v2083 = vadd.f32 %v2034, %v2082
        %2084 = vmatmul.bf16.gmra.mxu0 %v1635
        %v2085 = vpop.f32.mrf.mxu0
        %v2086 = vadd.f32 %v2037, %v2085
        %v2087 = vpop.f32.mrf.mxu0
        %v2088 = vadd.f32 %v2039, %v2087
        %2089 = vmatmul.bf16.gmra.mxu0 %v1639
        %v2090 = vpop.f32.mrf.mxu0
        %v2091 = vadd.f32 %v2042, %v2090
        %v2092 = vpop.f32.mrf.mxu0
        %v2093 = vadd.f32 %v2044, %v2092
        %2094 = vmatmul.bf16.gmra.mxu0 %v1643
        %v2095 = vpop.f32.mrf.mxu0
        %v2096 = vadd.f32 %v2047, %v2095
        %v2097 = vpop.f32.mrf.mxu0
        %v2098 = vadd.f32 %v2049, %v2097
        %2099 = vdwg.mxu0
        %v2100 = vmax.f32 %v2061, 0.0
        %v2101 = vmax.f32 %v2063, 0.0
        %v2102 = vmax.f32 %v2066, 0.0
        %v2103 = vmax.f32 %v2068, 0.0
        %v2104 = vmax.f32 %v2071, 0.0
        %v2105 = vmax.f32 %v2073, 0.0
        %v2106 = vmax.f32 %v2076, 0.0
        %v2107 = vmax.f32 %v2078, 0.0
        %v2108 = vmax.f32 %v2081, 0.0
        %v2109 = vmax.f32 %v2083, 0.0
        %v2110 = vmax.f32 %v2086, 0.0
        %v2111 = vmax.f32 %v2088, 0.0
        %v2112 = vmax.f32 %v2091, 0.0
        %v2113 = vmax.f32 %v2093, 0.0
        %v2114 = vmax.f32 %v2096, 0.0
        %v2115 = vmax.f32 %v2098, 0.0
        %v2116 = vpack.c.bf16 %v2101, %v2100
        %v2117 = vpack.c.bf16 %v2103, %v2102
        %v2118 = vpack.c.bf16 %v2105, %v2104
        %v2119 = vpack.c.bf16 %v2107, %v2106
        %v2120 = vpack.c.bf16 %v2109, %v2108
        %v2121 = vpack.c.bf16 %v2111, %v2110
        %v2122 = vpack.c.bf16 %v2113, %v2112
        %v2123 = vpack.c.bf16 %v2115, %v2114
        %v2124 = vld [vmem:[#allocation13] sm:$0xff]
        %v2125 = vld [vmem:[#allocation13 + $0x8] sm:$0xff]
        %v2126 = vld [vmem:[#allocation13 + $0x10] sm:$0xff]
        %v2127 = vld [vmem:[#allocation13 + $0x18] sm:$0xff]
        %v2128 = vld [vmem:[#allocation13 + $0x20] sm:$0xff]
        %v2129 = vld [vmem:[#allocation13 + $0x28] sm:$0xff]
        %v2130 = vld [vmem:[#allocation13 + $0x30] sm:$0xff]
        %v2131 = vld [vmem:[#allocation13 + $0x38] sm:$0xff]
        %v2132 = vld [vmem:[#allocation13 + $0x40] sm:$0xff]
        %v2133 = vld [vmem:[#allocation13 + $0x48] sm:$0xff]
        %v2134 = vld [vmem:[#allocation13 + $0x50] sm:$0xff]
        %v2135 = vld [vmem:[#allocation13 + $0x58] sm:$0xff]
        %v2136 = vld [vmem:[#allocation13 + $0x60] sm:$0xff]
        %v2137 = vld [vmem:[#allocation13 + $0x68] sm:$0xff]
        %v2138 = vld [vmem:[#allocation13 + $0x70] sm:$0xff]
        %v2139 = vld [vmem:[#allocation13 + $0x78] sm:$0xff]
        %v2140 = vld [vmem:[#allocation13 + $0x80] sm:$0xff]
        %v2141 = vld [vmem:[#allocation13 + $0x88] sm:$0xff]
        %v2142 = vld [vmem:[#allocation13 + $0x90] sm:$0xff]
        %v2143 = vld [vmem:[#allocation13 + $0x98] sm:$0xff]
        %v2144 = vld [vmem:[#allocation13 + $0xa0] sm:$0xff]
        %v2145 = vld [vmem:[#allocation13 + $0xa8] sm:$0xff]
        %v2146 = vld [vmem:[#allocation13 + $0xb0] sm:$0xff]
        %v2147 = vld [vmem:[#allocation13 + $0xb8] sm:$0xff]
        %v2148 = vld [vmem:[#allocation13 + $0xc0] sm:$0xff]
        %v2149 = vld [vmem:[#allocation13 + $0xc8] sm:$0xff]
        %v2150 = vld [vmem:[#allocation13 + $0xd0] sm:$0xff]
        %v2151 = vld [vmem:[#allocation13 + $0xd8] sm:$0xff]
        %v2152 = vld [vmem:[#allocation13 + $0xe0] sm:$0xff]
        %v2153 = vld [vmem:[#allocation13 + $0xe8] sm:$0xff]
        %v2154 = vld [vmem:[#allocation13 + $0xf0] sm:$0xff]
        %v2155 = vld [vmem:[#allocation13 + $0xf8] sm:$0xff]
        %v2156 = vld [vmem:[%s8] sm:$0xf]
        %v2158 = vperm.slane %v2156, 0
        %v2159 = vperm.slane %v2156, 1
        %v2160 = vperm.slane %v2156, 2
        %v2161 = vperm.slane %v2156, 3
        %v2198 = vunpack.c.l.b16 %v2124
        %v2199 = vunpack.c.h.b16 %v2124
        %v2200 = vunpack.c.l.b16 %v2125
        %v2201 = vunpack.c.h.b16 %v2125
        %v2202 = vunpack.c.l.b16 %v2126
        %v2203 = vunpack.c.h.b16 %v2126
        %v2204 = vunpack.c.l.b16 %v2127
        %v2205 = vunpack.c.h.b16 %v2127
        %v2206 = vunpack.c.l.b16 %v2128
        %v2207 = vunpack.c.h.b16 %v2128
        %v2208 = vunpack.c.l.b16 %v2129
        %v2209 = vunpack.c.h.b16 %v2129
        %v2210 = vunpack.c.l.b16 %v2130
        %v2211 = vunpack.c.h.b16 %v2130
        %v2212 = vunpack.c.l.b16 %v2131
        %v2213 = vunpack.c.h.b16 %v2131
        %v2214 = vunpack.c.l.b16 %v2132
        %v2215 = vunpack.c.h.b16 %v2132
        %v2216 = vunpack.c.l.b16 %v2133
        %v2217 = vunpack.c.h.b16 %v2133
        %v2218 = vunpack.c.l.b16 %v2134
        %v2219 = vunpack.c.h.b16 %v2134
        %v2220 = vunpack.c.l.b16 %v2135
        %v2221 = vunpack.c.h.b16 %v2135
        %v2222 = vunpack.c.l.b16 %v2136
        %v2223 = vunpack.c.h.b16 %v2136
        %v2224 = vunpack.c.l.b16 %v2137
        %v2225 = vunpack.c.h.b16 %v2137
        %v2226 = vunpack.c.l.b16 %v2138
        %v2227 = vunpack.c.h.b16 %v2138
        %v2228 = vunpack.c.l.b16 %v2139
        %v2229 = vunpack.c.h.b16 %v2139
        %v2230 = vunpack.c.l.b16 %v2140
        %v2231 = vunpack.c.h.b16 %v2140
        %v2232 = vunpack.c.l.b16 %v2141
        %v2233 = vunpack.c.h.b16 %v2141
        %v2234 = vunpack.c.l.b16 %v2142
        %v2235 = vunpack.c.h.b16 %v2142
        %v2236 = vunpack.c.l.b16 %v2143
        %v2237 = vunpack.c.h.b16 %v2143
        %v2238 = vunpack.c.l.b16 %v2144
        %v2239 = vunpack.c.h.b16 %v2144
        %v2240 = vunpack.c.l.b16 %v2145
        %v2241 = vunpack.c.h.b16 %v2145
        %v2242 = vunpack.c.l.b16 %v2146
        %v2243 = vunpack.c.h.b16 %v2146
        %v2244 = vunpack.c.l.b16 %v2147
        %v2245 = vunpack.c.h.b16 %v2147
        %v2246 = vunpack.c.l.b16 %v2148
        %v2247 = vunpack.c.h.b16 %v2148
        %v2248 = vunpack.c.l.b16 %v2149
        %v2249 = vunpack.c.h.b16 %v2149
        %v2250 = vunpack.c.l.b16 %v2150
        %v2251 = vunpack.c.h.b16 %v2150
        %v2252 = vunpack.c.l.b16 %v2151
        %v2253 = vunpack.c.h.b16 %v2151
        %v2254 = vunpack.c.l.b16 %v2152
        %v2255 = vunpack.c.h.b16 %v2152
        %v2256 = vunpack.c.l.b16 %v2153
        %v2257 = vunpack.c.h.b16 %v2153
        %v2258 = vunpack.c.l.b16 %v2154
        %v2259 = vunpack.c.h.b16 %v2154
        %v2260 = vunpack.c.l.b16 %v2155
        %v2261 = vunpack.c.h.b16 %v2155
        %v2262 = vpack.c.b16 %v2202, %v2198
        %v2263 = vpack.c.b16 %v2203, %v2199
        %v2264 = vpack.c.b16 %v2204, %v2200
        %v2265 = vpack.c.b16 %v2205, %v2201
        %v2266 = vpack.c.b16 %v2210, %v2206
        %v2267 = vpack.c.b16 %v2211, %v2207
        %v2268 = vpack.c.b16 %v2212, %v2208
        %v2269 = vpack.c.b16 %v2213, %v2209
        %v2270 = vpack.c.b16 %v2218, %v2214
        %v2271 = vpack.c.b16 %v2219, %v2215
        %v2272 = vpack.c.b16 %v2220, %v2216
        %v2273 = vpack.c.b16 %v2221, %v2217
        %v2274 = vpack.c.b16 %v2226, %v2222
        %v2275 = vpack.c.b16 %v2227, %v2223
        %v2276 = vpack.c.b16 %v2228, %v2224
        %v2277 = vpack.c.b16 %v2229, %v2225
        %v2278 = vpack.c.b16 %v2234, %v2230
        %v2279 = vpack.c.b16 %v2235, %v2231
        %v2280 = vpack.c.b16 %v2236, %v2232
        %v2281 = vpack.c.b16 %v2237, %v2233
        %v2282 = vpack.c.b16 %v2242, %v2238
        %v2283 = vpack.c.b16 %v2243, %v2239
        %v2284 = vpack.c.b16 %v2244, %v2240
        %v2285 = vpack.c.b16 %v2245, %v2241
        %v2286 = vpack.c.b16 %v2250, %v2246
        %v2287 = vpack.c.b16 %v2251, %v2247
        %v2288 = vpack.c.b16 %v2252, %v2248
        %v2289 = vpack.c.b16 %v2253, %v2249
        %v2290 = vpack.c.b16 %v2258, %v2254
        %v2291 = vpack.c.b16 %v2259, %v2255
        %v2292 = vpack.c.b16 %v2260, %v2256
        %v2293 = vpack.c.b16 %v2261, %v2257
        %2326 = vmatpush.bf16.msra.mxu0 %v2290
        %2327 = vmatpush.bf16.msra.mxu0 %v2286
        %2328 = vmatpush.bf16.msra.mxu0 %v2282
        %2329 = vmatpush.bf16.msra.mxu0 %v2278
        %2330 = vmatpush.bf16.msra.mxu0 %v2274
        %2331 = vmatpush.bf16.msra.mxu0 %v2270
        %2332 = vmatpush.bf16.msra.mxu0 %v2266
        %2333 = vmatpush.bf16.msra.mxu0 %v2262
        %2334 = vmatmul.bf16.gmra.mxu0 %v2116
        %v2335 = vpop.f32.mrf.mxu0
        %v2336 = vadd.f32 %v2158, %v2335
        %v2337 = vpop.f32.mrf.mxu0
        %v2338 = vadd.f32 %v2158, %v2337
        %2339 = vmatmul.bf16.gmra.mxu0 %v2117
        %v2340 = vpop.f32.mrf.mxu0
        %v2341 = vadd.f32 %v2158, %v2340
        %v2342 = vpop.f32.mrf.mxu0
        %v2343 = vadd.f32 %v2158, %v2342
        %2344 = vmatmul.bf16.gmra.mxu0 %v2118
        %v2345 = vpop.f32.mrf.mxu0
        %v2346 = vadd.f32 %v2158, %v2345
        %v2347 = vpop.f32.mrf.mxu0
        %v2348 = vadd.f32 %v2158, %v2347
        %2349 = vmatmul.bf16.gmra.mxu0 %v2119
        %v2350 = vpop.f32.mrf.mxu0
        %v2351 = vadd.f32 %v2158, %v2350
        %v2352 = vpop.f32.mrf.mxu0
        %v2353 = vadd.f32 %v2158, %v2352
        %2354 = vmatmul.bf16.gmra.mxu0 %v2120
        %v2355 = vpop.f32.mrf.mxu0
        %v2356 = vadd.f32 %v2158, %v2355
        %v2357 = vpop.f32.mrf.mxu0
        %v2358 = vadd.f32 %v2158, %v2357
        %2359 = vmatmul.bf16.gmra.mxu0 %v2121
        %v2360 = vpop.f32.mrf.mxu0
        %v2361 = vadd.f32 %v2158, %v2360
        %v2362 = vpop.f32.mrf.mxu0
        %v2363 = vadd.f32 %v2158, %v2362
        %2364 = vmatmul.bf16.gmra.mxu0 %v2122
        %v2365 = vpop.f32.mrf.mxu0
        %v2366 = vadd.f32 %v2158, %v2365
        %v2367 = vpop.f32.mrf.mxu0
        %v2368 = vadd.f32 %v2158, %v2367
        %2369 = vmatmul.bf16.gmra.mxu0 %v2123
        %v2370 = vpop.f32.mrf.mxu0
        %v2371 = vadd.f32 %v2158, %v2370
        %v2372 = vpop.f32.mrf.mxu0
        %v2373 = vadd.f32 %v2158, %v2372
        %2374 = vdwg.mxu0
        %2375 = vmatpush.bf16.msra.mxu0 %v2291
        %2376 = vmatpush.bf16.msra.mxu0 %v2287
        %2377 = vmatpush.bf16.msra.mxu0 %v2283
        %2378 = vmatpush.bf16.msra.mxu0 %v2279
        %2379 = vmatpush.bf16.msra.mxu0 %v2275
        %2380 = vmatpush.bf16.msra.mxu0 %v2271
        %2381 = vmatpush.bf16.msra.mxu0 %v2267
        %2382 = vmatpush.bf16.msra.mxu0 %v2263
        %2383 = vmatmul.bf16.gmra.mxu0 %v2116
        %v2384 = vpop.f32.mrf.mxu0
        %v2385 = vadd.f32 %v2159, %v2384
        %v2386 = vpop.f32.mrf.mxu0
        %v2387 = vadd.f32 %v2159, %v2386
        %2388 = vmatmul.bf16.gmra.mxu0 %v2117
        %v2389 = vpop.f32.mrf.mxu0
        %v2390 = vadd.f32 %v2159, %v2389
        %v2391 = vpop.f32.mrf.mxu0
        %v2392 = vadd.f32 %v2159, %v2391
        %2393 = vmatmul.bf16.gmra.mxu0 %v2118
        %v2394 = vpop.f32.mrf.mxu0
        %v2395 = vadd.f32 %v2159, %v2394
        %v2396 = vpop.f32.mrf.mxu0
        %v2397 = vadd.f32 %v2159, %v2396
        %2398 = vmatmul.bf16.gmra.mxu0 %v2119
        %v2399 = vpop.f32.mrf.mxu0
        %v2400 = vadd.f32 %v2159, %v2399
        %v2401 = vpop.f32.mrf.mxu0
        %v2402 = vadd.f32 %v2159, %v2401
        %2403 = vmatmul.bf16.gmra.mxu0 %v2120
        %v2404 = vpop.f32.mrf.mxu0
        %v2405 = vadd.f32 %v2159, %v2404
        %v2406 = vpop.f32.mrf.mxu0
        %v2407 = vadd.f32 %v2159, %v2406
        %2408 = vmatmul.bf16.gmra.mxu0 %v2121
        %v2409 = vpop.f32.mrf.mxu0
        %v2410 = vadd.f32 %v2159, %v2409
        %v2411 = vpop.f32.mrf.mxu0
        %v2412 = vadd.f32 %v2159, %v2411
        %2413 = vmatmul.bf16.gmra.mxu0 %v2122
        %v2414 = vpop.f32.mrf.mxu0
        %v2415 = vadd.f32 %v2159, %v2414
        %v2416 = vpop.f32.mrf.mxu0
        %v2417 = vadd.f32 %v2159, %v2416
        %2418 = vmatmul.bf16.gmra.mxu0 %v2123
        %v2419 = vpop.f32.mrf.mxu0
        %v2420 = vadd.f32 %v2159, %v2419
        %v2421 = vpop.f32.mrf.mxu0
        %v2422 = vadd.f32 %v2159, %v2421
        %2423 = vdwg.mxu0
        %2424 = vmatpush.bf16.msra.mxu0 %v2292
        %2425 = vmatpush.bf16.msra.mxu0 %v2288
        %2426 = vmatpush.bf16.msra.mxu0 %v2284
        %2427 = vmatpush.bf16.msra.mxu0 %v2280
        %2428 = vmatpush.bf16.msra.mxu0 %v2276
        %2429 = vmatpush.bf16.msra.mxu0 %v2272
        %2430 = vmatpush.bf16.msra.mxu0 %v2268
        %2431 = vmatpush.bf16.msra.mxu0 %v2264
        %2432 = vmatmul.bf16.gmra.mxu0 %v2116
        %v2433 = vpop.f32.mrf.mxu0
        %v2434 = vadd.f32 %v2160, %v2433
        %v2435 = vpop.f32.mrf.mxu0
        %v2436 = vadd.f32 %v2160, %v2435
        %2437 = vmatmul.bf16.gmra.mxu0 %v2117
        %v2438 = vpop.f32.mrf.mxu0
        %v2439 = vadd.f32 %v2160, %v2438
        %v2440 = vpop.f32.mrf.mxu0
        %v2441 = vadd.f32 %v2160, %v2440
        %2442 = vmatmul.bf16.gmra.mxu0 %v2118
        %v2443 = vpop.f32.mrf.mxu0
        %v2444 = vadd.f32 %v2160, %v2443
        %v2445 = vpop.f32.mrf.mxu0
        %v2446 = vadd.f32 %v2160, %v2445
        %2447 = vmatmul.bf16.gmra.mxu0 %v2119
        %v2448 = vpop.f32.mrf.mxu0
        %v2449 = vadd.f32 %v2160, %v2448
        %v2450 = vpop.f32.mrf.mxu0
        %v2451 = vadd.f32 %v2160, %v2450
        %2452 = vmatmul.bf16.gmra.mxu0 %v2120
        %v2453 = vpop.f32.mrf.mxu0
        %v2454 = vadd.f32 %v2160, %v2453
        %v2455 = vpop.f32.mrf.mxu0
        %v2456 = vadd.f32 %v2160, %v2455
        %2457 = vmatmul.bf16.gmra.mxu0 %v2121
        %v2458 = vpop.f32.mrf.mxu0
        %v2459 = vadd.f32 %v2160, %v2458
        %v2460 = vpop.f32.mrf.mxu0
        %v2461 = vadd.f32 %v2160, %v2460
        %2462 = vmatmul.bf16.gmra.mxu0 %v2122
        %v2463 = vpop.f32.mrf.mxu0
        %v2464 = vadd.f32 %v2160, %v2463
        %v2465 = vpop.f32.mrf.mxu0
        %v2466 = vadd.f32 %v2160, %v2465
        %2467 = vmatmul.bf16.gmra.mxu0 %v2123
        %v2468 = vpop.f32.mrf.mxu0
        %v2469 = vadd.f32 %v2160, %v2468
        %v2470 = vpop.f32.mrf.mxu0
        %v2471 = vadd.f32 %v2160, %v2470
        %2472 = vdwg.mxu0
        %2473 = vmatpush.bf16.msra.mxu0 %v2293
        %2474 = vmatpush.bf16.msra.mxu0 %v2289
        %2475 = vmatpush.bf16.msra.mxu0 %v2285
        %2476 = vmatpush.bf16.msra.mxu0 %v2281
        %2477 = vmatpush.bf16.msra.mxu0 %v2277
        %2478 = vmatpush.bf16.msra.mxu0 %v2273
        %2479 = vmatpush.bf16.msra.mxu0 %v2269
        %2480 = vmatpush.bf16.msra.mxu0 %v2265
        %2481 = vmatmul.bf16.gmra.mxu0 %v2116
        %v2482 = vpop.f32.mrf.mxu0
        %v2483 = vadd.f32 %v2161, %v2482
        %v2484 = vpop.f32.mrf.mxu0
        %v2485 = vadd.f32 %v2161, %v2484
        %2486 = vmatmul.bf16.gmra.mxu0 %v2117
        %v2487 = vpop.f32.mrf.mxu0
        %v2488 = vadd.f32 %v2161, %v2487
        %v2489 = vpop.f32.mrf.mxu0
        %v2490 = vadd.f32 %v2161, %v2489
        %2491 = vmatmul.bf16.gmra.mxu0 %v2118
        %v2492 = vpop.f32.mrf.mxu0
        %v2493 = vadd.f32 %v2161, %v2492
        %v2494 = vpop.f32.mrf.mxu0
        %v2495 = vadd.f32 %v2161, %v2494
        %2496 = vmatmul.bf16.gmra.mxu0 %v2119
        %v2497 = vpop.f32.mrf.mxu0
        %v2498 = vadd.f32 %v2161, %v2497
        %v2499 = vpop.f32.mrf.mxu0
        %v2500 = vadd.f32 %v2161, %v2499
        %2501 = vmatmul.bf16.gmra.mxu0 %v2120
        %v2502 = vpop.f32.mrf.mxu0
        %v2503 = vadd.f32 %v2161, %v2502
        %v2504 = vpop.f32.mrf.mxu0
        %v2505 = vadd.f32 %v2161, %v2504
        %2506 = vmatmul.bf16.gmra.mxu0 %v2121
        %v2507 = vpop.f32.mrf.mxu0
        %v2508 = vadd.f32 %v2161, %v2507
        %v2509 = vpop.f32.mrf.mxu0
        %v2510 = vadd.f32 %v2161, %v2509
        %2511 = vmatmul.bf16.gmra.mxu0 %v2122
        %v2512 = vpop.f32.mrf.mxu0
        %v2513 = vadd.f32 %v2161, %v2512
        %v2514 = vpop.f32.mrf.mxu0
        %v2515 = vadd.f32 %v2161, %v2514
        %2516 = vmatmul.bf16.gmra.mxu0 %v2123
        %v2517 = vpop.f32.mrf.mxu0
        %v2518 = vadd.f32 %v2161, %v2517
        %v2519 = vpop.f32.mrf.mxu0
        %v2520 = vadd.f32 %v2161, %v2519
        %2521 = vdwg.mxu0
        %v2522 = vmax.f32 %v2336, 0.0
        %v2523 = vmax.f32 %v2385, 0.0
        %v2524 = vmax.f32 %v2434, 0.0
        %v2525 = vmax.f32 %v2483, 0.0
        %v2526 = vmax.f32 %v2338, 0.0
        %v2527 = vmax.f32 %v2387, 0.0
        %v2528 = vmax.f32 %v2436, 0.0
        %v2529 = vmax.f32 %v2485, 0.0
        %v2530 = vmax.f32 %v2341, 0.0
        %v2531 = vmax.f32 %v2390, 0.0
        %v2532 = vmax.f32 %v2439, 0.0
        %v2533 = vmax.f32 %v2488, 0.0
        %v2534 = vmax.f32 %v2343, 0.0
        %v2535 = vmax.f32 %v2392, 0.0
        %v2536 = vmax.f32 %v2441, 0.0
        %v2537 = vmax.f32 %v2490, 0.0
        %v2538 = vmax.f32 %v2346, 0.0
        %v2539 = vmax.f32 %v2395, 0.0
        %v2540 = vmax.f32 %v2444, 0.0
        %v2541 = vmax.f32 %v2493, 0.0
        %v2542 = vmax.f32 %v2348, 0.0
        %v2543 = vmax.f32 %v2397, 0.0
        %v2544 = vmax.f32 %v2446, 0.0
        %v2545 = vmax.f32 %v2495, 0.0
        %v2546 = vmax.f32 %v2351, 0.0
        %v2547 = vmax.f32 %v2400, 0.0
        %v2548 = vmax.f32 %v2449, 0.0
        %v2549 = vmax.f32 %v2498, 0.0
        %v2550 = vmax.f32 %v2353, 0.0
        %v2551 = vmax.f32 %v2402, 0.0
        %v2552 = vmax.f32 %v2451, 0.0
        %v2553 = vmax.f32 %v2500, 0.0
        %v2554 = vmax.f32 %v2356, 0.0
        %v2555 = vmax.f32 %v2405, 0.0
        %v2556 = vmax.f32 %v2454, 0.0
        %v2557 = vmax.f32 %v2503, 0.0
        %v2558 = vmax.f32 %v2358, 0.0
        %v2559 = vmax.f32 %v2407, 0.0
        %v2560 = vmax.f32 %v2456, 0.0
        %v2561 = vmax.f32 %v2505, 0.0
        %v2562 = vmax.f32 %v2361, 0.0
        %v2563 = vmax.f32 %v2410, 0.0
        %v2564 = vmax.f32 %v2459, 0.0
        %v2565 = vmax.f32 %v2508, 0.0
        %v2566 = vmax.f32 %v2363, 0.0
        %v2567 = vmax.f32 %v2412, 0.0
        %v2568 = vmax.f32 %v2461, 0.0
        %v2569 = vmax.f32 %v2510, 0.0
        %v2570 = vmax.f32 %v2366, 0.0
        %v2571 = vmax.f32 %v2415, 0.0
        %v2572 = vmax.f32 %v2464, 0.0
        %v2573 = vmax.f32 %v2513, 0.0
        %v2574 = vmax.f32 %v2368, 0.0
        %v2575 = vmax.f32 %v2417, 0.0
        %v2576 = vmax.f32 %v2466, 0.0
        %v2577 = vmax.f32 %v2515, 0.0
        %v2578 = vmax.f32 %v2371, 0.0
        %v2579 = vmax.f32 %v2420, 0.0
        %v2580 = vmax.f32 %v2469, 0.0
        %v2581 = vmax.f32 %v2518, 0.0
        %v2582 = vmax.f32 %v2373, 0.0
        %v2583 = vmax.f32 %v2422, 0.0
        %v2584 = vmax.f32 %v2471, 0.0
        %v2585 = vmax.f32 %v2520, 0.0
        %2586 = vst [vmem:[%s447] sm:$0xff] %v2522
        %2587 = vst [vmem:[%s447 + $0x8] sm:$0xff] %v2523
        %2588 = vst [vmem:[%s447 + $0x10] sm:$0xff] %v2524
        %2589 = vst [vmem:[%s447 + $0x18] sm:$0xff] %v2525
        %2590 = vst [vmem:[%s447 + $0x20] sm:$0xff] %v2526
        %2591 = vst [vmem:[%s447 + $0x28] sm:$0xff] %v2527
        %2592 = vst [vmem:[%s447 + $0x30] sm:$0xff] %v2528
        %2593 = vst [vmem:[%s447 + $0x38] sm:$0xff] %v2529
        %2594 = vst [vmem:[%s447 + $0x40] sm:$0xff] %v2530
        %2595 = vst [vmem:[%s447 + $0x48] sm:$0xff] %v2531
        %2596 = vst [vmem:[%s447 + $0x50] sm:$0xff] %v2532
        %2597 = vst [vmem:[%s447 + $0x58] sm:$0xff] %v2533
        %2598 = vst [vmem:[%s447 + $0x60] sm:$0xff] %v2534
        %2599 = vst [vmem:[%s447 + $0x68] sm:$0xff] %v2535
        %2600 = vst [vmem:[%s447 + $0x70] sm:$0xff] %v2536
        %2601 = vst [vmem:[%s447 + $0x78] sm:$0xff] %v2537
        %2602 = vst [vmem:[%s447 + $0x80] sm:$0xff] %v2538
        %2603 = vst [vmem:[%s447 + $0x88] sm:$0xff] %v2539
        %2604 = vst [vmem:[%s447 + $0x90] sm:$0xff] %v2540
        %2605 = vst [vmem:[%s447 + $0x98] sm:$0xff] %v2541
        %2606 = vst [vmem:[%s447 + $0xa0] sm:$0xff] %v2542
        %2607 = vst [vmem:[%s447 + $0xa8] sm:$0xff] %v2543
        %2608 = vst [vmem:[%s447 + $0xb0] sm:$0xff] %v2544
        %2609 = vst [vmem:[%s447 + $0xb8] sm:$0xff] %v2545
        %2610 = vst [vmem:[%s447 + $0xc0] sm:$0xff] %v2546
        %2611 = vst [vmem:[%s447 + $0xc8] sm:$0xff] %v2547
        %2612 = vst [vmem:[%s447 + $0xd0] sm:$0xff] %v2548
        %2613 = vst [vmem:[%s447 + $0xd8] sm:$0xff] %v2549
        %2614 = vst [vmem:[%s447 + $0xe0] sm:$0xff] %v2550
        %2615 = vst [vmem:[%s447 + $0xe8] sm:$0xff] %v2551
        %2616 = vst [vmem:[%s447 + $0xf0] sm:$0xff] %v2552
        %2617 = vst [vmem:[%s447 + $0xf8] sm:$0xff] %v2553
        %2618 = vst [vmem:[%s447 + $0x100] sm:$0xff] %v2554
        %2619 = vst [vmem:[%s447 + $0x108] sm:$0xff] %v2555
        %2620 = vst [vmem:[%s447 + $0x110] sm:$0xff] %v2556
        %2621 = vst [vmem:[%s447 + $0x118] sm:$0xff] %v2557
        %2622 = vst [vmem:[%s447 + $0x120] sm:$0xff] %v2558
        %2623 = vst [vmem:[%s447 + $0x128] sm:$0xff] %v2559
        %2624 = vst [vmem:[%s447 + $0x130] sm:$0xff] %v2560
        %2625 = vst [vmem:[%s447 + $0x138] sm:$0xff] %v2561
        %2626 = vst [vmem:[%s447 + $0x140] sm:$0xff] %v2562
        %2627 = vst [vmem:[%s447 + $0x148] sm:$0xff] %v2563
        %2628 = vst [vmem:[%s447 + $0x150] sm:$0xff] %v2564
        %2629 = vst [vmem:[%s447 + $0x158] sm:$0xff] %v2565
        %2630 = vst [vmem:[%s447 + $0x160] sm:$0xff] %v2566
        %2631 = vst [vmem:[%s447 + $0x168] sm:$0xff] %v2567
        %2632 = vst [vmem:[%s447 + $0x170] sm:$0xff] %v2568
        %2633 = vst [vmem:[%s447 + $0x178] sm:$0xff] %v2569
        %2634 = vst [vmem:[%s447 + $0x180] sm:$0xff] %v2570
        %2635 = vst [vmem:[%s447 + $0x188] sm:$0xff] %v2571
        %2636 = vst [vmem:[%s447 + $0x190] sm:$0xff] %v2572
        %2637 = vst [vmem:[%s447 + $0x198] sm:$0xff] %v2573
        %2638 = vst [vmem:[%s447 + $0x1a0] sm:$0xff] %v2574
        %2639 = vst [vmem:[%s447 + $0x1a8] sm:$0xff] %v2575
        %2640 = vst [vmem:[%s447 + $0x1b0] sm:$0xff] %v2576
        %2641 = vst [vmem:[%s447 + $0x1b8] sm:$0xff] %v2577
        %2642 = vst [vmem:[%s447 + $0x1c0] sm:$0xff] %v2578
        %2643 = vst [vmem:[%s447 + $0x1c8] sm:$0xff] %v2579
        %2644 = vst [vmem:[%s447 + $0x1d0] sm:$0xff] %v2580
        %2645 = vst [vmem:[%s447 + $0x1d8] sm:$0xff] %v2581
        %2646 = vst [vmem:[%s447 + $0x1e0] sm:$0xff] %v2582
        %2647 = vst [vmem:[%s447 + $0x1e8] sm:$0xff] %v2583
        %2648 = vst [vmem:[%s447 + $0x1f0] sm:$0xff] %v2584
        %2649 = vst [vmem:[%s447 + $0x1f8] sm:$0xff] %v2585
        %s2650 = sand.u32 %s231, 1
        %s2651 = scalar_lea.sflag [#allocation4], %s2650
        %s2652 = sand.u32 %s231, 1
        %s2653 = smul.addr %s2652, 512
        %s2654 = scalar_lea.vmem [#allocation14], %s2653
        // Predicated region
        $region85: #{tpu_custom_call.1} parent=55 // pred_check
          %p2655 = pneg %p241
        $region86: #{tpu_custom_call.1} parent=55 // pred_check_branch
          %2657 = sbr.rel (%p2655) target = $region88
        $region87: #{tpu_custom_call.1} parent=55 // pred_region
          %s2658 = smul.u32 16, %s29
          %2660 = vsyncadd %s2651, 0
          %s2661 = smul.addr %s2658, 4
          %s2662 = smul.addr %s2661, 8
          %s2663 = scalar_lea.hbm %s9, %s2662
          %s2664 = sshll.u32 %s2654, 4
          %s2665 = int_to_ptr.vmem [resolvable:$true] %s2664
          %s2666 = sshll.u32 %s2663, 4
          %s2667 = int_to_ptr.hbm [resolvable:$true] %s2666
          %2672 = dma.vmem_to_hbm [thread:$0]  %s2665, 8192, %s2667, %s2651, 512, 512, 32
        $region88: #{tpu_custom_call.1} parent=55 // pred_fallthru
          _
      $region56: #{tpu_custom_call.1} parent=5 // pred_fallthru
        _
      %p2673 = scmp.le.s32.totalorder 2, %s24
      // Predicated region
      $region89: #{tpu_custom_call.1} parent=5 // pred_check
        %p2674 = pneg %p2673
      $region90: #{tpu_custom_call.1} parent=5 // pred_check_branch
        %2676 = sbr.rel (%p2674) target = $region92
      $region91: #{tpu_custom_call.1} parent=5 // pred_region
        %s2677 = ssub.s32 %s24, 2
        // Predicated region
        $region93: #{tpu_custom_call.1} parent=91 // pred_check
          %p2678 = pneg %p247
        $region94: #{tpu_custom_call.1} parent=91 // pred_check_branch
          %2680 = sbr.rel (%p2678) target = $region96
        $region95: #{tpu_custom_call.1} parent=91 // pred_region
          %s2681 = sand.u32 %s232, 1
          %s2682 = scalar_lea.sflag [#allocation4], %s2681
          %s2683 = sand.u32 %s232, 1
          %s2684 = smul.addr %s2683, 512
          %s2685 = scalar_lea.vmem [#allocation14], %s2684
          %2687 = dma.done %s2682, 8192
        $region96: #{tpu_custom_call.1} parent=91 // pred_fallthru
          _
      $region92: #{tpu_custom_call.1} parent=5 // pred_fallthru
        _
    $region6: #{tpu_custom_call.1} parent=1 // loop_footer
      %s28 = sadd.s32 1, %s24
    $region7: #{tpu_custom_call.1} parent=1 // loop_footer_branch
      %23 = sbr.rel target = $region3
    $region8: #{tpu_custom_call.1} parent=1 // loop_exit
      _
    %2688 = vsyncpa [#allocation3], 1
    %s2689 = scalar_lea.sflag [#allocation3], 1
    %2690 = vsyncpa %s2689, 1
    %2691 = vsyncpa [#allocation6], 1
    %2692 = vsyncpa [#allocation9], 1
    %2693 = vsyncpa [#allocation12], 1
    %2694 = vsyncpa [#allocation4], 1
    %s2695 = scalar_lea.sflag [#allocation4], 1
    %2696 = vsyncpa %s2695, 1

</llo_original>
